<compile_context>
chip_gen: v6e
topology: v6e:2x2x1
jax: 0.10.0
libtpu: 0.0.40
codegen_flags: <defaults>
</compile_context>

<pallas_src>
import functools

import numpy as np
import jax
import jax.numpy as jnp
from jax import lax
from jax.experimental import pallas as pl
from jax.experimental.pallas import tpu as pltpu


def _softdtw_kernel(x_ref, y_ref, out_ref, skew_ref, *,
                    gamma, normalize, N, M, NL, KP):
    """One batch tile: distances (MXU) -> skew build -> wavefront DP + softmin."""
    f32 = jnp.float32
    inf = f32(jnp.inf)
    ninf = f32(-jnp.inf)
    inv_gamma = f32(1.0 / gamma)

    x = x_ref[...]                       # (Bt, N, Dft)  native dtype
    y = y_ref[...]                       # (Bt, M, Dft)
    Bt = x.shape[0]

    # --------------- build the skewed cost matrix in VMEM -------------------
    # skew[b, r, n] = D[b, n-1, r-n+1]: anti-diagonal k of D is the lane-dense
    # row r = k-2 of the skew, with lane n already holding D[n-1, k-n-1].
    skew_ref[...] = jnp.zeros(skew_ref.shape, f32)       # defined padding, no stale VMEM

    x32 = x.astype(f32)
    x_sq = jnp.sum(x32 * x32, axis=2)                    # (Bt, N) f32 row norms

    # Per-lane sublane shift (= n - 1) for the butterfly, shared by all batches.
    lane_kp = lax.broadcasted_iota(jnp.int32, (KP, NL), 1)
    shift_amt = lane_kp - 1
    nbits = (N - 1).bit_length()                         # 0 when N == 1
    stage_take = [((shift_amt >> b) & 1) == 1 for b in range(nbits)]

    for bi in range(Bt):                                  # static loop, Bt <= 8
        xb = x[bi]                                        # (N, Dft)
        yb = y[bi]                                        # (M, Dft)
        # Cross term on the MXU (native dtype in, f32 accumulate); per-batch
        # chunking avoids materializing the full dt next to the skew (VMEM).
        xyb = lax.dot_general(yb, xb, (((1,), (1,)), ((), ())),
                              preferred_element_type=f32)             # (M, N)
        yb32 = yb.astype(f32)
        ysq_col = jnp.sum(yb32 * yb32, axis=1, keepdims=True)          # (M, 1)
        d_b = x_sq[bi:bi + 1, :] - 2.0 * xyb + ysq_col                 # (M, N) = D[bi].T
        # Place D[bi].T at rows 0..M-1 / lanes 0..N-1 of this batch's slab.
        skew_ref[bi:bi + 1, 0:M, 0:N] = jnp.expand_dims(d_b, 0)

        buf = skew_ref[bi]                                             # (KP, NL)
        buf = pltpu.roll(buf, 1, axis=1)      # lane shift: lane n <- D row n-1
        for b in range(nbits):                # butterfly: shift lane n down by n-1 rows
            rolled = pltpu.roll(buf, 1 << b, axis=0)
            buf = jnp.where(stage_take[b], rolled, buf)
        skew_ref[bi] = buf

    # --------------- wavefront DP over anti-diagonals k = n + m -------------
    lane_n = lax.broadcasted_iota(jnp.int32, (Bt, NL), 1)   # lane index == n

    prev = jnp.full((Bt, NL), inf, f32)          # R diagonal k-1
    prevr = jnp.full((Bt, NL), inf, f32)         # roll(prev, 1)
    ppr = jnp.where(lane_n == 1, f32(0.0), inf)  # roll(diag k-2, 1): R[0,0]=0 -> lane 1
    m_st = jnp.full((Bt, NL), ninf, f32)         # online LSE running max of -R/gamma
    l_st = jnp.zeros((Bt, NL), f32)              # online LSE running sum

    nblocks = KP // 8

    def block_body(kb, carry):
        prev, prevr, ppr, m_st, l_st = carry
        base = pl.multiple_of(kb * 8, 8)
        blk = skew_ref[:, pl.ds(base, 8), :]                 # (Bt, 8, NL) aligned load
        for i in range(8):                                   # statically unrolled
            k = kb * 8 + 2 + i                               # anti-diagonal index n+m
            cost = blk[:, i, :]                              # lane n: D[n-1, k-n-1]
            if normalize:
                cost = cost * (f32(1.0) / (kb.astype(f32) * 8.0 + f32(2 + i)))
            cand = cost + jnp.minimum(jnp.minimum(ppr, prevr), prev)
            lo = jnp.maximum(1, k - M)
            hi = jnp.minimum(N, k - 1)
            valid = (lane_n >= lo) & (lane_n <= hi)
            new_d = jnp.where(valid, cand, inf)
            # Single-exp online logsumexp of z = -R/gamma per DP row n.
            z = -new_d * inv_gamma
            m_new = jnp.where(valid, jnp.maximum(m_st, z), m_st)
            arg = jnp.where(valid, jnp.minimum(z, m_st) - m_new, f32(0.0))
            e = jnp.exp(arg)                                 # finite / -inf only, no NaN
            l_st = jnp.where(valid,
                             jnp.where(z > m_st, l_st * e + 1.0, l_st + e),
                             l_st)
            m_st = m_new
            ppr = prevr                                      # reuse previous roll
            prev = new_d
            prevr = pltpu.roll(new_d, 1, axis=1)             # 1 XLU roll per DP step
        return prev, prevr, ppr, m_st, l_st

    _, _, _, m_st, l_st = lax.fori_loop(
        0, nblocks, block_body, (prev, prevr, ppr, m_st, l_st))

    # Tile contribution: -sum_{b, n=1..N} logsumexp_m(-R[b,n,m]/gamma)
    row_mask = (lane_n >= 1) & (lane_n <= N)
    lse = m_st + jnp.log(l_st)
    tile_sum = -jnp.sum(jnp.where(row_mask, lse, f32(0.0)))
    out_ref[...] = jnp.full(out_ref.shape, tile_sum, f32)    # lane-dense store


def _auto_block_b(B):
    # Fill the 8 sublanes of the DP-state vregs when possible.
    for cand in (8, 4, 2, 1):
        if B % cand == 0:
            return cand
    return 1


def soft_dtw(X, Y, gamma=1.0, normalize=False, block_b=None):
    """Pallas SoftDTW forward.  Returns a scalar float32."""
    B, N, Dft = X.shape
    M = Y.shape[1]
    if block_b is None or block_b <= 0 or B % block_b != 0:
        block_b = _auto_block_b(B)
    num_tiles = B // block_b

    NL = 128 * pl.cdiv(N + 1, 128)      # DP lane width (lane index n = 0..N)
    KP = 8 * pl.cdiv(N + M - 1, 8)      # skew sublane count (# anti-diagonals)

    kernel = functools.partial(
        _softdtw_kernel, gamma=float(gamma), normalize=bool(normalize),
        N=int(N), M=int(M), NL=int(NL), KP=int(KP))

    # VMEM budget: skew scratch + one (KP, NL) build slab + double-buffered IO.
    skew_bytes = block_b * KP * NL * 4
    io_bytes = 2 * block_b * (N + M) * Dft * np.dtype(X.dtype).itemsize
    vmem_limit = int(min(110 * 2**20,
                         max(32 * 2**20, 2 * skew_bytes + 2 * io_bytes + (4 << 20))))

    partial_sums = pl.pallas_call(
        kernel,
        out_shape=jax.ShapeDtypeStruct((num_tiles, 8, 128), jnp.float32),
        grid=(num_tiles,),
        in_specs=[
            pl.BlockSpec((block_b, N, Dft), lambda i: (i, 0, 0)),
            pl.BlockSpec((block_b, M, Dft), lambda i: (i, 0, 0)),
        ],
        out_specs=pl.BlockSpec((1, 8, 128), lambda i: (i, 0, 0)),
        scratch_shapes=[pltpu.VMEM((block_b, KP, NL), jnp.float32)],
        compiler_params=pltpu.CompilerParams(
            dimension_semantics=("parallel",),
            vmem_limit_bytes=vmem_limit),
    )(X, Y)
    # Tiny final reduction over batch tiles in plain JAX.
    return jnp.sum(partial_sums[:, 0, 0])


def _soft_dtw_reference(X, Y, gamma=1.0, normalize=False):
    """NumPy reference mirroring the PyTorch module exactly."""
    X = np.asarray(X, np.float64)
    Y = np.asarray(Y, np.float64)
    B, N, _ = X.shape
    M = Y.shape[1]
    X_sq = np.sum(X ** 2, axis=2, keepdims=True)
    Y_sq = np.sum(Y ** 2, axis=2, keepdims=True)
    XY = np.einsum('bnd,bmd->bnm', X, Y)
    D = X_sq - 2.0 * XY + np.transpose(Y_sq, (0, 2, 1))
    R = np.full((B, N + 2, M + 2), np.inf)
    R[:, 0, 0] = 0.0
    for n in range(1, N + 1):
        for m in range(1, M + 1):
            cost = D[:, n - 1, m - 1]
            if normalize:
                cost = cost / (n + m)
            R[:, n, m] = cost + np.minimum(
                np.minimum(R[:, n - 1, m - 1], R[:, n - 1, m]), R[:, n, m - 1])
    Rint = R[:, 1:N + 1, 1:M + 1]
    z = -Rint / gamma
    zmax = z.max(axis=2, keepdims=True)
    lse = zmax[..., 0] + np.log(np.sum(np.exp(z - zmax), axis=2))
    softmin = -gamma * lse
    return np.sum(softmin) / gamma


if __name__ == "__main__":
    key = jax.random.PRNGKey(0)
    kx, ky, kx2, ky2 = jax.random.split(key, 4)

    # Small shapes consistent with the module's forward: X (B,N,D), Y (B,M,D).
    B, N, M, Dft = 2, 8, 8, 16
    X = jax.random.normal(kx, (B, N, Dft), dtype=jnp.float32)
    Y = jax.random.normal(ky, (B, M, Dft), dtype=jnp.float32)

    out = jax.block_until_ready(soft_dtw(X, Y, gamma=1.0, normalize=False))
    ref = _soft_dtw_reference(np.asarray(X), np.asarray(Y), gamma=1.0,
                              normalize=False)
    assert np.allclose(np.asarray(out), ref, rtol=1e-3, atol=1e-2), \
        (float(out), ref)

    out2 = jax.block_until_ready(soft_dtw(X, Y, gamma=0.5, normalize=True))
    ref2 = _soft_dtw_reference(np.asarray(X), np.asarray(Y), gamma=0.5,
                               normalize=True)
    assert np.allclose(np.asarray(out2), ref2, rtol=1e-3, atol=1e-2), \
        (float(out2), ref2)

    # Larger batch exercising block_b=8 (all 8 sublanes filled) and N != M.
    B2, N2, M2 = 8, 12, 10
    X2 = jax.random.normal(kx2, (B2, N2, Dft), dtype=jnp.float32)
    Y2 = jax.random.normal(ky2, (B2, M2, Dft), dtype=jnp.float32)
    out3 = jax.block_until_ready(soft_dtw(X2, Y2, gamma=1.0, normalize=False))
    ref3 = _soft_dtw_reference(np.asarray(X2), np.asarray(Y2), gamma=1.0,
                               normalize=False)
    assert np.allclose(np.asarray(out3), ref3, rtol=1e-3, atol=1e-2), \
        (float(out3), ref3)

    print("KERNEL_OK")
</pallas_src>

<mosaic_0001>
module attributes {stable_mosaic.version = 11 : i64} {
  func.func @_softdtw_kernel(%arg0: i32, %arg1: memref<2x8x16xf32, #tpu.memory_space<vmem>>, %arg2: memref<2x8x16xf32, #tpu.memory_space<vmem>>, %arg3: memref<1x8x128xf32, #tpu.memory_space<vmem>>, %arg4: memref<2x16x128xf32, #tpu.memory_space<vmem>>) attributes {dimension_semantics = [#tpu.dimension_semantics<parallel>], iteration_bounds = array<i64: 1>, scalar_prefetch = 0 : i64, scratch_operands = 1 : i64, tpu.core_type = #tpu.core_type<tc>, window_params = [{transform_indices = @transform_0, window_bounds = array<i64: 2, 8, 16>}, {transform_indices = @transform_1, window_bounds = array<i64: 2, 8, 16>}, {transform_indices = @transform_2, window_bounds = array<i64: 1, 8, 128>}]} {
    %c0 = arith.constant 0 : index
    %c0_0 = arith.constant 0 : index
    %c0_1 = arith.constant 0 : index
    %0 = vector.load %arg1[%c0, %c0_0, %c0_1] : memref<2x8x16xf32, #tpu.memory_space<vmem>>, vector<2x8x16xf32>
    %c0_2 = arith.constant 0 : index
    %c0_3 = arith.constant 0 : index
    %c0_4 = arith.constant 0 : index
    %1 = vector.load %arg2[%c0_2, %c0_3, %c0_4] : memref<2x8x16xf32, #tpu.memory_space<vmem>>, vector<2x8x16xf32>
    %cst = arith.constant 0.000000e+00 : f32
    %2 = vector.broadcast %cst : f32 to vector<2x16x128xf32>
    %c0_5 = arith.constant 0 : index
    %c0_6 = arith.constant 0 : index
    %c0_7 = arith.constant 0 : index
    %3 = vector.load %arg4[%c0_5, %c0_6, %c0_7] : memref<2x16x128xf32, #tpu.memory_space<vmem>>, vector<2x16x128xf32>
    tpu.vector_store %arg4[%c0_5, %c0_6, %c0_7], %2 {strides = array<i32>} : memref<2x16x128xf32, #tpu.memory_space<vmem>>, vector<2x16x128xf32>,
    %4 = arith.mulf %0, %0 : vector<2x8x16xf32>
    %cst_8 = arith.constant dense<0.000000e+00> : vector<2x8xf32>
    %5 = vector.multi_reduction <add>, %4, %cst_8 [2] : vector<2x8x16xf32> to vector<2x8xf32>
    %6 = tpu.iota {dimensions = array<i32: 1>} : vector<16x128xi32>
    %c1_i32 = arith.constant 1 : i32
    %7 = vector.broadcast %c1_i32 : i32 to vector<16x128xi32>
    %8 = arith.subi %6, %7 : vector<16x128xi32>
    %c0_i32 = arith.constant 0 : i32
    %9 = vector.broadcast %c0_i32 : i32 to vector<16x128xi32>
    %10 = arith.shrsi %8, %9 : vector<16x128xi32>
    %c1_i32_9 = arith.constant 1 : i32
    %11 = vector.broadcast %c1_i32_9 : i32 to vector<16x128xi32>
    %12 = arith.andi %10, %11 : vector<16x128xi32>
    %c1_i32_10 = arith.constant 1 : i32
    %13 = vector.broadcast %c1_i32_10 : i32 to vector<16x128xi32>
    %14 = arith.cmpi eq, %12, %13 : vector<16x128xi32>
    %c1_i32_11 = arith.constant 1 : i32
    %15 = vector.broadcast %c1_i32_11 : i32 to vector<16x128xi32>
    %16 = arith.shrsi %8, %15 : vector<16x128xi32>
    %c1_i32_12 = arith.constant 1 : i32
    %17 = vector.broadcast %c1_i32_12 : i32 to vector<16x128xi32>
    %18 = arith.andi %16, %17 : vector<16x128xi32>
    %c1_i32_13 = arith.constant 1 : i32
    %19 = vector.broadcast %c1_i32_13 : i32 to vector<16x128xi32>
    %20 = arith.cmpi eq, %18, %19 : vector<16x128xi32>
    %c2_i32 = arith.constant 2 : i32
    %21 = vector.broadcast %c2_i32 : i32 to vector<16x128xi32>
    %22 = arith.shrsi %8, %21 : vector<16x128xi32>
    %c1_i32_14 = arith.constant 1 : i32
    %23 = vector.broadcast %c1_i32_14 : i32 to vector<16x128xi32>
    %24 = arith.andi %22, %23 : vector<16x128xi32>
    %c1_i32_15 = arith.constant 1 : i32
    %25 = vector.broadcast %c1_i32_15 : i32 to vector<16x128xi32>
    %26 = arith.cmpi eq, %24, %25 : vector<16x128xi32>
    %27 = vector.extract_strided_slice %0 {offsets = [0, 0, 0], sizes = [1, 8, 16], strides = [1, 1, 1]} : vector<2x8x16xf32> to vector<1x8x16xf32>
    %28 = vector.shape_cast %27 : vector<1x8x16xf32> to vector<8x16xf32>
    %29 = vector.extract_strided_slice %1 {offsets = [0, 0, 0], sizes = [1, 8, 16], strides = [1, 1, 1]} : vector<2x8x16xf32> to vector<1x8x16xf32>
    %30 = vector.shape_cast %29 : vector<1x8x16xf32> to vector<8x16xf32>
    %cst_16 = arith.constant dense<0.000000e+00> : vector<8x8xf32>
    %31 = tpu.matmul %30, %28, %cst_16 {dimension_numbers = #tpu.dot_dimension_numbers<[1], [1], [0], [0], [0, 0, 1, 0], [], []>} : vector<8x16xf32>, vector<8x16xf32>, vector<8x8xf32> -> vector<8x8xf32>
    %32 = arith.mulf %30, %30 : vector<8x16xf32>
    %cst_17 = arith.constant dense<0.000000e+00> : vector<8xf32>
    %33 = vector.multi_reduction <add>, %32, %cst_17 [1] : vector<8x16xf32> to vector<8xf32>
    %34 = vector.shape_cast %33 : vector<8xf32> to vector<8x1xf32>
    %35 = vector.extract_strided_slice %5 {offsets = [0, 0], sizes = [1, 8], strides = [1, 1]} : vector<2x8xf32> to vector<1x8xf32>
    %cst_18 = arith.constant 2.000000e+00 : f32
    %36 = vector.broadcast %cst_18 : f32 to vector<8x8xf32>
    %37 = arith.mulf %36, %31 : vector<8x8xf32>
    %38 = vector.broadcast %35 : vector<1x8xf32> to vector<8x8xf32>
    %39 = arith.subf %38, %37 : vector<8x8xf32>
    %40 = vector.broadcast %34 : vector<8x1xf32> to vector<8x8xf32>
    %41 = arith.addf %39, %40 : vector<8x8xf32>
    %42 = vector.shape_cast %41 : vector<8x8xf32> to vector<1x8x8xf32>
    %c0_19 = arith.constant 0 : index
    %c0_20 = arith.constant 0 : index
    %c0_21 = arith.constant 0 : index
    %43 = vector.load %arg4[%c0_19, %c0_20, %c0_21] : memref<2x16x128xf32, #tpu.memory_space<vmem>>, vector<1x8x8xf32>
    tpu.vector_store %arg4[%c0_19, %c0_20, %c0_21], %42 {strides = array<i32>} : memref<2x16x128xf32, #tpu.memory_space<vmem>>, vector<1x8x8xf32>,
    %c0_22 = arith.constant 0 : index
    %c0_23 = arith.constant 0 : index
    %c0_24 = arith.constant 0 : index
    %44 = vector.load %arg4[%c0_22, %c0_23, %c0_24] : memref<2x16x128xf32, #tpu.memory_space<vmem>>, vector<1x16x128xf32>
    %45 = vector.shape_cast %44 : vector<1x16x128xf32> to vector<16x128xf32>
    %c1_i32_25 = arith.constant 1 : i32
    %46 = tpu.dynamic_rotate %45 by %c1_i32_25 dim 1 : vector<16x128xf32>, i32 -> vector<16x128xf32>
    %c1_i32_26 = arith.constant 1 : i32
    %47 = tpu.dynamic_rotate %46 by %c1_i32_26 dim 0 : vector<16x128xf32>, i32 -> vector<16x128xf32>
    %48 = arith.select %14, %47, %46 : vector<16x128xi1>, vector<16x128xf32>
    %c2_i32_27 = arith.constant 2 : i32
    %49 = tpu.dynamic_rotate %48 by %c2_i32_27 dim 0 : vector<16x128xf32>, i32 -> vector<16x128xf32>
    %50 = arith.select %20, %49, %48 : vector<16x128xi1>, vector<16x128xf32>
    %c4_i32 = arith.constant 4 : i32
    %51 = tpu.dynamic_rotate %50 by %c4_i32 dim 0 : vector<16x128xf32>, i32 -> vector<16x128xf32>
    %52 = arith.select %26, %51, %50 : vector<16x128xi1>, vector<16x128xf32>
    %c0_28 = arith.constant 0 : index
    %c0_29 = arith.constant 0 : index
    %c0_30 = arith.constant 0 : index
    %53 = vector.load %arg4[%c0_28, %c0_29, %c0_30] : memref<2x16x128xf32, #tpu.memory_space<vmem>>, vector<1x16x128xf32>
    %54 = vector.shape_cast %53 : vector<1x16x128xf32> to vector<16x128xf32>
    %55 = vector.shape_cast %52 : vector<16x128xf32> to vector<1x16x128xf32>
    tpu.vector_store %arg4[%c0_28, %c0_29, %c0_30], %55 {strides = array<i32>} : memref<2x16x128xf32, #tpu.memory_space<vmem>>, vector<1x16x128xf32>,
    %56 = vector.extract_strided_slice %0 {offsets = [1, 0, 0], sizes = [1, 8, 16], strides = [1, 1, 1]} : vector<2x8x16xf32> to vector<1x8x16xf32>
    %57 = vector.shape_cast %56 : vector<1x8x16xf32> to vector<8x16xf32>
    %58 = vector.extract_strided_slice %1 {offsets = [1, 0, 0], sizes = [1, 8, 16], strides = [1, 1, 1]} : vector<2x8x16xf32> to vector<1x8x16xf32>
    %59 = vector.shape_cast %58 : vector<1x8x16xf32> to vector<8x16xf32>
    %cst_31 = arith.constant dense<0.000000e+00> : vector<8x8xf32>
    %60 = tpu.matmul %59, %57, %cst_31 {dimension_numbers = #tpu.dot_dimension_numbers<[1], [1], [0], [0], [0, 0, 1, 0], [], []>} : vector<8x16xf32>, vector<8x16xf32>, vector<8x8xf32> -> vector<8x8xf32>
    %61 = arith.mulf %59, %59 : vector<8x16xf32>
    %cst_32 = arith.constant dense<0.000000e+00> : vector<8xf32>
    %62 = vector.multi_reduction <add>, %61, %cst_32 [1] : vector<8x16xf32> to vector<8xf32>
    %63 = vector.shape_cast %62 : vector<8xf32> to vector<8x1xf32>
    %64 = vector.extract_strided_slice %5 {offsets = [1, 0], sizes = [1, 8], strides = [1, 1]} : vector<2x8xf32> to vector<1x8xf32>
    %cst_33 = arith.constant 2.000000e+00 : f32
    %65 = vector.broadcast %cst_33 : f32 to vector<8x8xf32>
    %66 = arith.mulf %65, %60 : vector<8x8xf32>
    %67 = vector.broadcast %64 : vector<1x8xf32> to vector<8x8xf32>
    %68 = arith.subf %67, %66 : vector<8x8xf32>
    %69 = vector.broadcast %63 : vector<8x1xf32> to vector<8x8xf32>
    %70 = arith.addf %68, %69 : vector<8x8xf32>
    %71 = vector.shape_cast %70 : vector<8x8xf32> to vector<1x8x8xf32>
    %c1 = arith.constant 1 : index
    %c0_34 = arith.constant 0 : index
    %c0_35 = arith.constant 0 : index
    %72 = vector.load %arg4[%c1, %c0_34, %c0_35] : memref<2x16x128xf32, #tpu.memory_space<vmem>>, vector<1x8x8xf32>
    tpu.vector_store %arg4[%c1, %c0_34, %c0_35], %71 {strides = array<i32>} : memref<2x16x128xf32, #tpu.memory_space<vmem>>, vector<1x8x8xf32>,
    %c1_36 = arith.constant 1 : index
    %c0_37 = arith.constant 0 : index
    %c0_38 = arith.constant 0 : index
    %73 = vector.load %arg4[%c1_36, %c0_37, %c0_38] : memref<2x16x128xf32, #tpu.memory_space<vmem>>, vector<1x16x128xf32>
    %74 = vector.shape_cast %73 : vector<1x16x128xf32> to vector<16x128xf32>
    %c1_i32_39 = arith.constant 1 : i32
    %75 = tpu.dynamic_rotate %74 by %c1_i32_39 dim 1 : vector<16x128xf32>, i32 -> vector<16x128xf32>
    %c1_i32_40 = arith.constant 1 : i32
    %76 = tpu.dynamic_rotate %75 by %c1_i32_40 dim 0 : vector<16x128xf32>, i32 -> vector<16x128xf32>
    %77 = arith.select %14, %76, %75 : vector<16x128xi1>, vector<16x128xf32>
    %c2_i32_41 = arith.constant 2 : i32
    %78 = tpu.dynamic_rotate %77 by %c2_i32_41 dim 0 : vector<16x128xf32>, i32 -> vector<16x128xf32>
    %79 = arith.select %20, %78, %77 : vector<16x128xi1>, vector<16x128xf32>
    %c4_i32_42 = arith.constant 4 : i32
    %80 = tpu.dynamic_rotate %79 by %c4_i32_42 dim 0 : vector<16x128xf32>, i32 -> vector<16x128xf32>
    %81 = arith.select %26, %80, %79 : vector<16x128xi1>, vector<16x128xf32>
    %c1_43 = arith.constant 1 : index
    %c0_44 = arith.constant 0 : index
    %c0_45 = arith.constant 0 : index
    %82 = vector.load %arg4[%c1_43, %c0_44, %c0_45] : memref<2x16x128xf32, #tpu.memory_space<vmem>>, vector<1x16x128xf32>
    %83 = vector.shape_cast %82 : vector<1x16x128xf32> to vector<16x128xf32>
    %84 = vector.shape_cast %81 : vector<16x128xf32> to vector<1x16x128xf32>
    tpu.vector_store %arg4[%c1_43, %c0_44, %c0_45], %84 {strides = array<i32>} : memref<2x16x128xf32, #tpu.memory_space<vmem>>, vector<1x16x128xf32>,
    %85 = tpu.iota {dimensions = array<i32: 1>} : vector<2x128xi32>
    %cst_46 = arith.constant 0x7F800000 : f32
    %86 = vector.broadcast %cst_46 : f32 to vector<2x128xf32>
    %cst_47 = arith.constant 0x7F800000 : f32
    %87 = vector.broadcast %cst_47 : f32 to vector<2x128xf32>
    %c1_i32_48 = arith.constant 1 : i32
    %88 = vector.broadcast %c1_i32_48 : i32 to vector<2x128xi32>
    %89 = arith.cmpi eq, %85, %88 : vector<2x128xi32>
    %cst_49 = arith.constant 0.000000e+00 : f32
    %cst_50 = arith.constant 0x7F800000 : f32
    %90 = vector.broadcast %cst_49 : f32 to vector<2x128xf32>
    %91 = vector.broadcast %cst_50 : f32 to vector<2x128xf32>
    %92 = arith.select %89, %90, %91 : vector<2x128xi1>, vector<2x128xf32>
    %cst_51 = arith.constant 0xFF800000 : f32
    %93 = vector.broadcast %cst_51 : f32 to vector<2x128xf32>
    %cst_52 = arith.constant 0.000000e+00 : f32
    %94 = vector.broadcast %cst_52 : f32 to vector<2x128xf32>
    %cst_53 = arith.constant 0x7F800000 : f32
    %cst_54 = arith.constant 1.000000e+00 : f32
    %c0_i32_55 = arith.constant 0 : i32
    %c2_i32_56 = arith.constant 2 : i32
    %95 = arith.addi %c0_i32_55, %c2_i32_56 : i32
    %c1_i32_57 = arith.constant 1 : i32
    %96:5 = scf.for %arg5 = %c0_i32_55 to %95 step %c1_i32_57 iter_args(%arg6 = %86, %arg7 = %87, %arg8 = %92, %arg9 = %93, %arg10 = %94) -> (vector<2x128xf32>, vector<2x128xf32>, vector<2x128xf32>, vector<2x128xf32>, vector<2x128xf32>)  : i32 {
      %c8_i32_66 = arith.constant 8 : i32
      %113 = arith.muli %arg5, %c8_i32_66 : i32
      %114 = tpu.assume_multiple %113, 8 : i32
      %c0_67 = arith.constant 0 : index
      %115 = arith.index_cast %114 : i32 to index
      %c0_68 = arith.constant 0 : index
      %116 = vector.load %arg4[%c0_67, %115, %c0_68] : memref<2x16x128xf32, #tpu.memory_space<vmem>>, vector<2x8x128xf32>
      %c8_i32_69 = arith.constant 8 : i32
      %117 = arith.muli %arg5, %c8_i32_69 : i32
      %c2_i32_70 = arith.constant 2 : i32
      %118 = arith.addi %117, %c2_i32_70 : i32
      %c0_i32_71 = arith.constant 0 : i32
      %119 = arith.addi %118, %c0_i32_71 : i32
      %120 = vector.extract_strided_slice %116 {offsets = [0, 0, 0], sizes = [2, 1, 128], strides = [1, 1, 1]} : vector<2x8x128xf32> to vector<2x1x128xf32>
      %121 = vector.shape_cast %120 : vector<2x1x128xf32> to vector<2x128xf32>
      %122 = arith.minimumf %arg8, %arg7 : vector<2x128xf32>
      %123 = arith.minimumf %122, %arg6 : vector<2x128xf32>
      %124 = arith.addf %121, %123 : vector<2x128xf32>
      %c8_i32_72 = arith.constant 8 : i32
      %125 = arith.subi %119, %c8_i32_72 : i32
      %c1_i32_73 = arith.constant 1 : i32
      %126 = arith.maxsi %c1_i32_73, %125 : i32
      %c1_i32_74 = arith.constant 1 : i32
      %127 = arith.subi %119, %c1_i32_74 : i32
      %c8_i32_75 = arith.constant 8 : i32
      %128 = arith.minsi %c8_i32_75, %127 : i32
      %129 = vector.broadcast %126 : i32 to vector<2x128xi32>
      %130 = arith.cmpi sge, %85, %129 : vector<2x128xi32>
      %131 = vector.broadcast %128 : i32 to vector<2x128xi32>
      %132 = arith.cmpi sle, %85, %131 : vector<2x128xi32>
      %133 = arith.andi %130, %132 : vector<2x128xi1>
      %134 = vector.broadcast %cst_53 : f32 to vector<2x128xf32>
      %135 = arith.select %133, %124, %134 : vector<2x128xi1>, vector<2x128xf32>
      %cst_76 = arith.constant 0.000000e+00 : f32
      %136 = vector.broadcast %cst_76 : f32 to vector<2x128xf32>
      %137 = arith.subf %136, %135 : vector<2x128xf32>
      %138 = vector.broadcast %cst_54 : f32 to vector<2x128xf32>
      %139 = arith.mulf %137, %138 : vector<2x128xf32>
      %140 = arith.maximumf %arg9, %139 : vector<2x128xf32>
      %141 = arith.select %133, %140, %arg9 : vector<2x128xi1>, vector<2x128xf32>
      %142 = arith.minimumf %139, %arg9 : vector<2x128xf32>
      %143 = arith.subf %142, %141 : vector<2x128xf32>
      %cst_77 = arith.constant 0.000000e+00 : f32
      %144 = vector.broadcast %cst_77 : f32 to vector<2x128xf32>
      %145 = arith.select %133, %143, %144 : vector<2x128xi1>, vector<2x128xf32>
      %146 = math.exp %145 : vector<2x128xf32>
      %147 = arith.cmpf ogt, %139, %arg9 : vector<2x128xf32>
      %148 = arith.mulf %arg10, %146 : vector<2x128xf32>
      %cst_78 = arith.constant 1.000000e+00 : f32
      %149 = vector.broadcast %cst_78 : f32 to vector<2x128xf32>
      %150 = arith.addf %148, %149 : vector<2x128xf32>
      %151 = arith.addf %arg10, %146 : vector<2x128xf32>
      %152 = arith.select %147, %150, %151 : vector<2x128xi1>, vector<2x128xf32>
      %153 = arith.select %133, %152, %arg10 : vector<2x128xi1>, vector<2x128xf32>
      %c1_i32_79 = arith.constant 1 : i32
      %154 = tpu.dynamic_rotate %135 by %c1_i32_79 dim 1 : vector<2x128xf32>, i32 -> vector<2x128xf32>
      %c8_i32_80 = arith.constant 8 : i32
      %155 = arith.muli %arg5, %c8_i32_80 : i32
      %c2_i32_81 = arith.constant 2 : i32
      %156 = arith.addi %155, %c2_i32_81 : i32
      %c1_i32_82 = arith.constant 1 : i32
      %157 = arith.addi %156, %c1_i32_82 : i32
      %158 = vector.extract_strided_slice %116 {offsets = [0, 1, 0], sizes = [2, 1, 128], strides = [1, 1, 1]} : vector<2x8x128xf32> to vector<2x1x128xf32>
      %159 = vector.shape_cast %158 : vector<2x1x128xf32> to vector<2x128xf32>
      %160 = arith.minimumf %arg7, %154 : vector<2x128xf32>
      %161 = arith.minimumf %160, %135 : vector<2x128xf32>
      %162 = arith.addf %159, %161 : vector<2x128xf32>
      %c8_i32_83 = arith.constant 8 : i32
      %163 = arith.subi %157, %c8_i32_83 : i32
      %c1_i32_84 = arith.constant 1 : i32
      %164 = arith.maxsi %c1_i32_84, %163 : i32
      %c1_i32_85 = arith.constant 1 : i32
      %165 = arith.subi %157, %c1_i32_85 : i32
      %c8_i32_86 = arith.constant 8 : i32
      %166 = arith.minsi %c8_i32_86, %165 : i32
      %167 = vector.broadcast %164 : i32 to vector<2x128xi32>
      %168 = arith.cmpi sge, %85, %167 : vector<2x128xi32>
      %169 = vector.broadcast %166 : i32 to vector<2x128xi32>
      %170 = arith.cmpi sle, %85, %169 : vector<2x128xi32>
      %171 = arith.andi %168, %170 : vector<2x128xi1>
      %172 = vector.broadcast %cst_53 : f32 to vector<2x128xf32>
      %173 = arith.select %171, %162, %172 : vector<2x128xi1>, vector<2x128xf32>
      %cst_87 = arith.constant 0.000000e+00 : f32
      %174 = vector.broadcast %cst_87 : f32 to vector<2x128xf32>
      %175 = arith.subf %174, %173 : vector<2x128xf32>
      %176 = vector.broadcast %cst_54 : f32 to vector<2x128xf32>
      %177 = arith.mulf %175, %176 : vector<2x128xf32>
      %178 = arith.maximumf %141, %177 : vector<2x128xf32>
      %179 = arith.select %171, %178, %141 : vector<2x128xi1>, vector<2x128xf32>
      %180 = arith.minimumf %177, %141 : vector<2x128xf32>
      %181 = arith.subf %180, %179 : vector<2x128xf32>
      %cst_88 = arith.constant 0.000000e+00 : f32
      %182 = vector.broadcast %cst_88 : f32 to vector<2x128xf32>
      %183 = arith.select %171, %181, %182 : vector<2x128xi1>, vector<2x128xf32>
      %184 = math.exp %183 : vector<2x128xf32>
      %185 = arith.cmpf ogt, %177, %141 : vector<2x128xf32>
      %186 = arith.mulf %153, %184 : vector<2x128xf32>
      %cst_89 = arith.constant 1.000000e+00 : f32
      %187 = vector.broadcast %cst_89 : f32 to vector<2x128xf32>
      %188 = arith.addf %186, %187 : vector<2x128xf32>
      %189 = arith.addf %153, %184 : vector<2x128xf32>
      %190 = arith.select %185, %188, %189 : vector<2x128xi1>, vector<2x128xf32>
      %191 = arith.select %171, %190, %153 : vector<2x128xi1>, vector<2x128xf32>
      %c1_i32_90 = arith.constant 1 : i32
      %192 = tpu.dynamic_rotate %173 by %c1_i32_90 dim 1 : vector<2x128xf32>, i32 -> vector<2x128xf32>
      %c8_i32_91 = arith.constant 8 : i32
      %193 = arith.muli %arg5, %c8_i32_91 : i32
      %c2_i32_92 = arith.constant 2 : i32
      %194 = arith.addi %193, %c2_i32_92 : i32
      %c2_i32_93 = arith.constant 2 : i32
      %195 = arith.addi %194, %c2_i32_93 : i32
      %196 = vector.extract_strided_slice %116 {offsets = [0, 2, 0], sizes = [2, 1, 128], strides = [1, 1, 1]} : vector<2x8x128xf32> to vector<2x1x128xf32>
      %197 = vector.shape_cast %196 : vector<2x1x128xf32> to vector<2x128xf32>
      %198 = arith.minimumf %154, %192 : vector<2x128xf32>
      %199 = arith.minimumf %198, %173 : vector<2x128xf32>
      %200 = arith.addf %197, %199 : vector<2x128xf32>
      %c8_i32_94 = arith.constant 8 : i32
      %201 = arith.subi %195, %c8_i32_94 : i32
      %c1_i32_95 = arith.constant 1 : i32
      %202 = arith.maxsi %c1_i32_95, %201 : i32
      %c1_i32_96 = arith.constant 1 : i32
      %203 = arith.subi %195, %c1_i32_96 : i32
      %c8_i32_97 = arith.constant 8 : i32
      %204 = arith.minsi %c8_i32_97, %203 : i32
      %205 = vector.broadcast %202 : i32 to vector<2x128xi32>
      %206 = arith.cmpi sge, %85, %205 : vector<2x128xi32>
      %207 = vector.broadcast %204 : i32 to vector<2x128xi32>
      %208 = arith.cmpi sle, %85, %207 : vector<2x128xi32>
      %209 = arith.andi %206, %208 : vector<2x128xi1>
      %210 = vector.broadcast %cst_53 : f32 to vector<2x128xf32>
      %211 = arith.select %209, %200, %210 : vector<2x128xi1>, vector<2x128xf32>
      %cst_98 = arith.constant 0.000000e+00 : f32
      %212 = vector.broadcast %cst_98 : f32 to vector<2x128xf32>
      %213 = arith.subf %212, %211 : vector<2x128xf32>
      %214 = vector.broadcast %cst_54 : f32 to vector<2x128xf32>
      %215 = arith.mulf %213, %214 : vector<2x128xf32>
      %216 = arith.maximumf %179, %215 : vector<2x128xf32>
      %217 = arith.select %209, %216, %179 : vector<2x128xi1>, vector<2x128xf32>
      %218 = arith.minimumf %215, %179 : vector<2x128xf32>
      %219 = arith.subf %218, %217 : vector<2x128xf32>
      %cst_99 = arith.constant 0.000000e+00 : f32
      %220 = vector.broadcast %cst_99 : f32 to vector<2x128xf32>
      %221 = arith.select %209, %219, %220 : vector<2x128xi1>, vector<2x128xf32>
      %222 = math.exp %221 : vector<2x128xf32>
      %223 = arith.cmpf ogt, %215, %179 : vector<2x128xf32>
      %224 = arith.mulf %191, %222 : vector<2x128xf32>
      %cst_100 = arith.constant 1.000000e+00 : f32
      %225 = vector.broadcast %cst_100 : f32 to vector<2x128xf32>
      %226 = arith.addf %224, %225 : vector<2x128xf32>
      %227 = arith.addf %191, %222 : vector<2x128xf32>
      %228 = arith.select %223, %226, %227 : vector<2x128xi1>, vector<2x128xf32>
      %229 = arith.select %209, %228, %191 : vector<2x128xi1>, vector<2x128xf32>
      %c1_i32_101 = arith.constant 1 : i32
      %230 = tpu.dynamic_rotate %211 by %c1_i32_101 dim 1 : vector<2x128xf32>, i32 -> vector<2x128xf32>
      %c8_i32_102 = arith.constant 8 : i32
      %231 = arith.muli %arg5, %c8_i32_102 : i32
      %c2_i32_103 = arith.constant 2 : i32
      %232 = arith.addi %231, %c2_i32_103 : i32
      %c3_i32 = arith.constant 3 : i32
      %233 = arith.addi %232, %c3_i32 : i32
      %234 = vector.extract_strided_slice %116 {offsets = [0, 3, 0], sizes = [2, 1, 128], strides = [1, 1, 1]} : vector<2x8x128xf32> to vector<2x1x128xf32>
      %235 = vector.shape_cast %234 : vector<2x1x128xf32> to vector<2x128xf32>
      %236 = arith.minimumf %192, %230 : vector<2x128xf32>
      %237 = arith.minimumf %236, %211 : vector<2x128xf32>
      %238 = arith.addf %235, %237 : vector<2x128xf32>
      %c8_i32_104 = arith.constant 8 : i32
      %239 = arith.subi %233, %c8_i32_104 : i32
      %c1_i32_105 = arith.constant 1 : i32
      %240 = arith.maxsi %c1_i32_105, %239 : i32
      %c1_i32_106 = arith.constant 1 : i32
      %241 = arith.subi %233, %c1_i32_106 : i32
      %c8_i32_107 = arith.constant 8 : i32
      %242 = arith.minsi %c8_i32_107, %241 : i32
      %243 = vector.broadcast %240 : i32 to vector<2x128xi32>
      %244 = arith.cmpi sge, %85, %243 : vector<2x128xi32>
      %245 = vector.broadcast %242 : i32 to vector<2x128xi32>
      %246 = arith.cmpi sle, %85, %245 : vector<2x128xi32>
      %247 = arith.andi %244, %246 : vector<2x128xi1>
      %248 = vector.broadcast %cst_53 : f32 to vector<2x128xf32>
      %249 = arith.select %247, %238, %248 : vector<2x128xi1>, vector<2x128xf32>
      %cst_108 = arith.constant 0.000000e+00 : f32
      %250 = vector.broadcast %cst_108 : f32 to vector<2x128xf32>
      %251 = arith.subf %250, %249 : vector<2x128xf32>
      %252 = vector.broadcast %cst_54 : f32 to vector<2x128xf32>
      %253 = arith.mulf %251, %252 : vector<2x128xf32>
      %254 = arith.maximumf %217, %253 : vector<2x128xf32>
      %255 = arith.select %247, %254, %217 : vector<2x128xi1>, vector<2x128xf32>
      %256 = arith.minimumf %253, %217 : vector<2x128xf32>
      %257 = arith.subf %256, %255 : vector<2x128xf32>
      %cst_109 = arith.constant 0.000000e+00 : f32
      %258 = vector.broadcast %cst_109 : f32 to vector<2x128xf32>
      %259 = arith.select %247, %257, %258 : vector<2x128xi1>, vector<2x128xf32>
      %260 = math.exp %259 : vector<2x128xf32>
      %261 = arith.cmpf ogt, %253, %217 : vector<2x128xf32>
      %262 = arith.mulf %229, %260 : vector<2x128xf32>
      %cst_110 = arith.constant 1.000000e+00 : f32
      %263 = vector.broadcast %cst_110 : f32 to vector<2x128xf32>
      %264 = arith.addf %262, %263 : vector<2x128xf32>
      %265 = arith.addf %229, %260 : vector<2x128xf32>
      %266 = arith.select %261, %264, %265 : vector<2x128xi1>, vector<2x128xf32>
      %267 = arith.select %247, %266, %229 : vector<2x128xi1>, vector<2x128xf32>
      %c1_i32_111 = arith.constant 1 : i32
      %268 = tpu.dynamic_rotate %249 by %c1_i32_111 dim 1 : vector<2x128xf32>, i32 -> vector<2x128xf32>
      %c8_i32_112 = arith.constant 8 : i32
      %269 = arith.muli %arg5, %c8_i32_112 : i32
      %c2_i32_113 = arith.constant 2 : i32
      %270 = arith.addi %269, %c2_i32_113 : i32
      %c4_i32_114 = arith.constant 4 : i32
      %271 = arith.addi %270, %c4_i32_114 : i32
      %272 = vector.extract_strided_slice %116 {offsets = [0, 4, 0], sizes = [2, 1, 128], strides = [1, 1, 1]} : vector<2x8x128xf32> to vector<2x1x128xf32>
      %273 = vector.shape_cast %272 : vector<2x1x128xf32> to vector<2x128xf32>
      %274 = arith.minimumf %230, %268 : vector<2x128xf32>
      %275 = arith.minimumf %274, %249 : vector<2x128xf32>
      %276 = arith.addf %273, %275 : vector<2x128xf32>
      %c8_i32_115 = arith.constant 8 : i32
      %277 = arith.subi %271, %c8_i32_115 : i32
      %c1_i32_116 = arith.constant 1 : i32
      %278 = arith.maxsi %c1_i32_116, %277 : i32
      %c1_i32_117 = arith.constant 1 : i32
      %279 = arith.subi %271, %c1_i32_117 : i32
      %c8_i32_118 = arith.constant 8 : i32
      %280 = arith.minsi %c8_i32_118, %279 : i32
      %281 = vector.broadcast %278 : i32 to vector<2x128xi32>
      %282 = arith.cmpi sge, %85, %281 : vector<2x128xi32>
      %283 = vector.broadcast %280 : i32 to vector<2x128xi32>
      %284 = arith.cmpi sle, %85, %283 : vector<2x128xi32>
      %285 = arith.andi %282, %284 : vector<2x128xi1>
      %286 = vector.broadcast %cst_53 : f32 to vector<2x128xf32>
      %287 = arith.select %285, %276, %286 : vector<2x128xi1>, vector<2x128xf32>
      %cst_119 = arith.constant 0.000000e+00 : f32
      %288 = vector.broadcast %cst_119 : f32 to vector<2x128xf32>
      %289 = arith.subf %288, %287 : vector<2x128xf32>
      %290 = vector.broadcast %cst_54 : f32 to vector<2x128xf32>
      %291 = arith.mulf %289, %290 : vector<2x128xf32>
      %292 = arith.maximumf %255, %291 : vector<2x128xf32>
      %293 = arith.select %285, %292, %255 : vector<2x128xi1>, vector<2x128xf32>
      %294 = arith.minimumf %291, %255 : vector<2x128xf32>
      %295 = arith.subf %294, %293 : vector<2x128xf32>
      %cst_120 = arith.constant 0.000000e+00 : f32
      %296 = vector.broadcast %cst_120 : f32 to vector<2x128xf32>
      %297 = arith.select %285, %295, %296 : vector<2x128xi1>, vector<2x128xf32>
      %298 = math.exp %297 : vector<2x128xf32>
      %299 = arith.cmpf ogt, %291, %255 : vector<2x128xf32>
      %300 = arith.mulf %267, %298 : vector<2x128xf32>
      %cst_121 = arith.constant 1.000000e+00 : f32
      %301 = vector.broadcast %cst_121 : f32 to vector<2x128xf32>
      %302 = arith.addf %300, %301 : vector<2x128xf32>
      %303 = arith.addf %267, %298 : vector<2x128xf32>
      %304 = arith.select %299, %302, %303 : vector<2x128xi1>, vector<2x128xf32>
      %305 = arith.select %285, %304, %267 : vector<2x128xi1>, vector<2x128xf32>
      %c1_i32_122 = arith.constant 1 : i32
      %306 = tpu.dynamic_rotate %287 by %c1_i32_122 dim 1 : vector<2x128xf32>, i32 -> vector<2x128xf32>
      %c8_i32_123 = arith.constant 8 : i32
      %307 = arith.muli %arg5, %c8_i32_123 : i32
      %c2_i32_124 = arith.constant 2 : i32
      %308 = arith.addi %307, %c2_i32_124 : i32
      %c5_i32 = arith.constant 5 : i32
      %309 = arith.addi %308, %c5_i32 : i32
      %310 = vector.extract_strided_slice %116 {offsets = [0, 5, 0], sizes = [2, 1, 128], strides = [1, 1, 1]} : vector<2x8x128xf32> to vector<2x1x128xf32>
      %311 = vector.shape_cast %310 : vector<2x1x128xf32> to vector<2x128xf32>
      %312 = arith.minimumf %268, %306 : vector<2x128xf32>
      %313 = arith.minimumf %312, %287 : vector<2x128xf32>
      %314 = arith.addf %311, %313 : vector<2x128xf32>
      %c8_i32_125 = arith.constant 8 : i32
      %315 = arith.subi %309, %c8_i32_125 : i32
      %c1_i32_126 = arith.constant 1 : i32
      %316 = arith.maxsi %c1_i32_126, %315 : i32
      %c1_i32_127 = arith.constant 1 : i32
      %317 = arith.subi %309, %c1_i32_127 : i32
      %c8_i32_128 = arith.constant 8 : i32
      %318 = arith.minsi %c8_i32_128, %317 : i32
      %319 = vector.broadcast %316 : i32 to vector<2x128xi32>
      %320 = arith.cmpi sge, %85, %319 : vector<2x128xi32>
      %321 = vector.broadcast %318 : i32 to vector<2x128xi32>
      %322 = arith.cmpi sle, %85, %321 : vector<2x128xi32>
      %323 = arith.andi %320, %322 : vector<2x128xi1>
      %324 = vector.broadcast %cst_53 : f32 to vector<2x128xf32>
      %325 = arith.select %323, %314, %324 : vector<2x128xi1>, vector<2x128xf32>
      %cst_129 = arith.constant 0.000000e+00 : f32
      %326 = vector.broadcast %cst_129 : f32 to vector<2x128xf32>
      %327 = arith.subf %326, %325 : vector<2x128xf32>
      %328 = vector.broadcast %cst_54 : f32 to vector<2x128xf32>
      %329 = arith.mulf %327, %328 : vector<2x128xf32>
      %330 = arith.maximumf %293, %329 : vector<2x128xf32>
      %331 = arith.select %323, %330, %293 : vector<2x128xi1>, vector<2x128xf32>
      %332 = arith.minimumf %329, %293 : vector<2x128xf32>
      %333 = arith.subf %332, %331 : vector<2x128xf32>
      %cst_130 = arith.constant 0.000000e+00 : f32
      %334 = vector.broadcast %cst_130 : f32 to vector<2x128xf32>
      %335 = arith.select %323, %333, %334 : vector<2x128xi1>, vector<2x128xf32>
      %336 = math.exp %335 : vector<2x128xf32>
      %337 = arith.cmpf ogt, %329, %293 : vector<2x128xf32>
      %338 = arith.mulf %305, %336 : vector<2x128xf32>
      %cst_131 = arith.constant 1.000000e+00 : f32
      %339 = vector.broadcast %cst_131 : f32 to vector<2x128xf32>
      %340 = arith.addf %338, %339 : vector<2x128xf32>
      %341 = arith.addf %305, %336 : vector<2x128xf32>
      %342 = arith.select %337, %340, %341 : vector<2x128xi1>, vector<2x128xf32>
      %343 = arith.select %323, %342, %305 : vector<2x128xi1>, vector<2x128xf32>
      %c1_i32_132 = arith.constant 1 : i32
      %344 = tpu.dynamic_rotate %325 by %c1_i32_132 dim 1 : vector<2x128xf32>, i32 -> vector<2x128xf32>
      %c8_i32_133 = arith.constant 8 : i32
      %345 = arith.muli %arg5, %c8_i32_133 : i32
      %c2_i32_134 = arith.constant 2 : i32
      %346 = arith.addi %345, %c2_i32_134 : i32
      %c6_i32 = arith.constant 6 : i32
      %347 = arith.addi %346, %c6_i32 : i32
      %348 = vector.extract_strided_slice %116 {offsets = [0, 6, 0], sizes = [2, 1, 128], strides = [1, 1, 1]} : vector<2x8x128xf32> to vector<2x1x128xf32>
      %349 = vector.shape_cast %348 : vector<2x1x128xf32> to vector<2x128xf32>
      %350 = arith.minimumf %306, %344 : vector<2x128xf32>
      %351 = arith.minimumf %350, %325 : vector<2x128xf32>
      %352 = arith.addf %349, %351 : vector<2x128xf32>
      %c8_i32_135 = arith.constant 8 : i32
      %353 = arith.subi %347, %c8_i32_135 : i32
      %c1_i32_136 = arith.constant 1 : i32
      %354 = arith.maxsi %c1_i32_136, %353 : i32
      %c1_i32_137 = arith.constant 1 : i32
      %355 = arith.subi %347, %c1_i32_137 : i32
      %c8_i32_138 = arith.constant 8 : i32
      %356 = arith.minsi %c8_i32_138, %355 : i32
      %357 = vector.broadcast %354 : i32 to vector<2x128xi32>
      %358 = arith.cmpi sge, %85, %357 : vector<2x128xi32>
      %359 = vector.broadcast %356 : i32 to vector<2x128xi32>
      %360 = arith.cmpi sle, %85, %359 : vector<2x128xi32>
      %361 = arith.andi %358, %360 : vector<2x128xi1>
      %362 = vector.broadcast %cst_53 : f32 to vector<2x128xf32>
      %363 = arith.select %361, %352, %362 : vector<2x128xi1>, vector<2x128xf32>
      %cst_139 = arith.constant 0.000000e+00 : f32
      %364 = vector.broadcast %cst_139 : f32 to vector<2x128xf32>
      %365 = arith.subf %364, %363 : vector<2x128xf32>
      %366 = vector.broadcast %cst_54 : f32 to vector<2x128xf32>
      %367 = arith.mulf %365, %366 : vector<2x128xf32>
      %368 = arith.maximumf %331, %367 : vector<2x128xf32>
      %369 = arith.select %361, %368, %331 : vector<2x128xi1>, vector<2x128xf32>
      %370 = arith.minimumf %367, %331 : vector<2x128xf32>
      %371 = arith.subf %370, %369 : vector<2x128xf32>
      %cst_140 = arith.constant 0.000000e+00 : f32
      %372 = vector.broadcast %cst_140 : f32 to vector<2x128xf32>
      %373 = arith.select %361, %371, %372 : vector<2x128xi1>, vector<2x128xf32>
      %374 = math.exp %373 : vector<2x128xf32>
      %375 = arith.cmpf ogt, %367, %331 : vector<2x128xf32>
      %376 = arith.mulf %343, %374 : vector<2x128xf32>
      %cst_141 = arith.constant 1.000000e+00 : f32
      %377 = vector.broadcast %cst_141 : f32 to vector<2x128xf32>
      %378 = arith.addf %376, %377 : vector<2x128xf32>
      %379 = arith.addf %343, %374 : vector<2x128xf32>
      %380 = arith.select %375, %378, %379 : vector<2x128xi1>, vector<2x128xf32>
      %381 = arith.select %361, %380, %343 : vector<2x128xi1>, vector<2x128xf32>
      %c1_i32_142 = arith.constant 1 : i32
      %382 = tpu.dynamic_rotate %363 by %c1_i32_142 dim 1 : vector<2x128xf32>, i32 -> vector<2x128xf32>
      %c8_i32_143 = arith.constant 8 : i32
      %383 = arith.muli %arg5, %c8_i32_143 : i32
      %c2_i32_144 = arith.constant 2 : i32
      %384 = arith.addi %383, %c2_i32_144 : i32
      %c7_i32 = arith.constant 7 : i32
      %385 = arith.addi %384, %c7_i32 : i32
      %386 = vector.extract_strided_slice %116 {offsets = [0, 7, 0], sizes = [2, 1, 128], strides = [1, 1, 1]} : vector<2x8x128xf32> to vector<2x1x128xf32>
      %387 = vector.shape_cast %386 : vector<2x1x128xf32> to vector<2x128xf32>
      %388 = arith.minimumf %344, %382 : vector<2x128xf32>
      %389 = arith.minimumf %388, %363 : vector<2x128xf32>
      %390 = arith.addf %387, %389 : vector<2x128xf32>
      %c8_i32_145 = arith.constant 8 : i32
      %391 = arith.subi %385, %c8_i32_145 : i32
      %c1_i32_146 = arith.constant 1 : i32
      %392 = arith.maxsi %c1_i32_146, %391 : i32
      %c1_i32_147 = arith.constant 1 : i32
      %393 = arith.subi %385, %c1_i32_147 : i32
      %c8_i32_148 = arith.constant 8 : i32
      %394 = arith.minsi %c8_i32_148, %393 : i32
      %395 = vector.broadcast %392 : i32 to vector<2x128xi32>
      %396 = arith.cmpi sge, %85, %395 : vector<2x128xi32>
      %397 = vector.broadcast %394 : i32 to vector<2x128xi32>
      %398 = arith.cmpi sle, %85, %397 : vector<2x128xi32>
      %399 = arith.andi %396, %398 : vector<2x128xi1>
      %400 = vector.broadcast %cst_53 : f32 to vector<2x128xf32>
      %401 = arith.select %399, %390, %400 : vector<2x128xi1>, vector<2x128xf32>
      %cst_149 = arith.constant 0.000000e+00 : f32
      %402 = vector.broadcast %cst_149 : f32 to vector<2x128xf32>
      %403 = arith.subf %402, %401 : vector<2x128xf32>
      %404 = vector.broadcast %cst_54 : f32 to vector<2x128xf32>
      %405 = arith.mulf %403, %404 : vector<2x128xf32>
      %406 = arith.maximumf %369, %405 : vector<2x128xf32>
      %407 = arith.select %399, %406, %369 : vector<2x128xi1>, vector<2x128xf32>
      %408 = arith.minimumf %405, %369 : vector<2x128xf32>
      %409 = arith.subf %408, %407 : vector<2x128xf32>
      %cst_150 = arith.constant 0.000000e+00 : f32
      %410 = vector.broadcast %cst_150 : f32 to vector<2x128xf32>
      %411 = arith.select %399, %409, %410 : vector<2x128xi1>, vector<2x128xf32>
      %412 = math.exp %411 : vector<2x128xf32>
      %413 = arith.cmpf ogt, %405, %369 : vector<2x128xf32>
      %414 = arith.mulf %381, %412 : vector<2x128xf32>
      %cst_151 = arith.constant 1.000000e+00 : f32
      %415 = vector.broadcast %cst_151 : f32 to vector<2x128xf32>
      %416 = arith.addf %414, %415 : vector<2x128xf32>
      %417 = arith.addf %381, %412 : vector<2x128xf32>
      %418 = arith.select %413, %416, %417 : vector<2x128xi1>, vector<2x128xf32>
      %419 = arith.select %399, %418, %381 : vector<2x128xi1>, vector<2x128xf32>
      %c1_i32_152 = arith.constant 1 : i32
      %420 = tpu.dynamic_rotate %401 by %c1_i32_152 dim 1 : vector<2x128xf32>, i32 -> vector<2x128xf32>
      scf.yield %401, %420, %382, %407, %419 : vector<2x128xf32>, vector<2x128xf32>, vector<2x128xf32>, vector<2x128xf32>, vector<2x128xf32>
    }
    %c2_i32_58 = arith.constant 2 : i32
    %c1_i32_59 = arith.constant 1 : i32
    %97 = vector.broadcast %c1_i32_59 : i32 to vector<2x128xi32>
    %98 = arith.cmpi sge, %85, %97 : vector<2x128xi32>
    %c8_i32 = arith.constant 8 : i32
    %99 = vector.broadcast %c8_i32 : i32 to vector<2x128xi32>
    %100 = arith.cmpi sle, %85, %99 : vector<2x128xi32>
    %101 = arith.andi %98, %100 : vector<2x128xi1>
    %102 = math.log %96#4 : vector<2x128xf32>
    %103 = arith.addf %96#3, %102 : vector<2x128xf32>
    %cst_60 = arith.constant 0.000000e+00 : f32
    %104 = vector.broadcast %cst_60 : f32 to vector<2x128xf32>
    %105 = arith.select %101, %103, %104 : vector<2x128xi1>, vector<2x128xf32>
    %106 = vector.shape_cast %105 : vector<2x128xf32> to vector<1x2x128xf32>
    %cst_61 = arith.constant dense<0.000000e+00> : vector<1xf32>
    %107 = vector.multi_reduction <add>, %106, %cst_61 [1, 2] : vector<1x2x128xf32> to vector<1xf32>
    %108 = vector.shape_cast %107 : vector<1xf32> to vector<1x1x1xf32>
    %109 = vector.extract %108[0, 0, 0] : f32 from vector<1x1x1xf32>
    %cst_62 = arith.constant 0.000000e+00 : f32
    %110 = arith.subf %cst_62, %109 : f32
    %111 = vector.broadcast %110 : f32 to vector<1x8x128xf32>
    %c0_63 = arith.constant 0 : index
    %c0_64 = arith.constant 0 : index
    %c0_65 = arith.constant 0 : index
    %112 = vector.load %arg3[%c0_63, %c0_64, %c0_65] : memref<1x8x128xf32, #tpu.memory_space<vmem>>, vector<1x8x128xf32>
    tpu.vector_store %arg3[%c0_63, %c0_64, %c0_65], %111 {strides = array<i32>} : memref<1x8x128xf32, #tpu.memory_space<vmem>>, vector<1x8x128xf32>,
    return
  }
  func.func @transform_0(%arg0: i32) -> (i32, i32, i32) {
    %c0_i32 = arith.constant 0 : i32
    %c0_i32_0 = arith.constant 0 : i32
    %c0_i32_1 = arith.constant 0 : i32
    return %arg0, %c0_i32, %c0_i32_0 : i32, i32, i32
  }
  func.func @transform_1(%arg0: i32) -> (i32, i32, i32) {
    %c0_i32 = arith.constant 0 : i32
    %c0_i32_0 = arith.constant 0 : i32
    %c0_i32_1 = arith.constant 0 : i32
    return %arg0, %c0_i32, %c0_i32_0 : i32, i32, i32
  }
  func.func @transform_2(%arg0: i32) -> (i32, i32, i32) {
    %c0_i32 = arith.constant 0 : i32
    %c0_i32_0 = arith.constant 0 : i32
    %c0_i32_1 = arith.constant 0 : i32
    return %arg0, %c0_i32, %c0_i32_0 : i32, i32, i32
  }
}

</mosaic_0001>

<llo_original>
// kernel: tpu_custom_call.1
$region0: #{tpu_custom_call.1}
  #allocation0 [shape = 'u32[]', space=smem, size = 0x4, offset = 0x4, fixed_abs, tag = 'smem constant byte address 0x4 - core index']
  #allocation1 [shape = 'u32[144,128]{1,0:T(1,128)}', space=vmem, size = 0x12000, scoped, tag = 'internal scratch']
  #allocation2 [shape = 'f32[2,16,128]{2,1,0:T(8,128)}', space=vmem, size = 0x4000, scoped, tag = 'scratch operand']
  %s0 = inlined_call_operand.hbm [shape: f32[2,8,16], index: 0, kind: input, shape index: {}]
  %s1 = inlined_call_operand.hbm [shape: f32[2,8,16], index: 1, kind: input, shape index: {}]
  %s2 = inlined_call_operand.hbm [shape: f32[1,8,128], index: 2, kind: output, shape index: {}]
  %s3 = sld [smem:[#allocation0]]
  $region33: #{tpu_custom_call.1} parent=0
    _
  %s5 = ssub.s32 1, %s3
  %s6 = scalar_select 0, %s5, %s3
  $region1: #{tpu_custom_call.1} parent=0
    #allocation3 [shape = 'u8[8192]{0}', space=vmem, size = 0x2000, scoped, tag = 'input window, operand 0, single buffered']
    #allocation4 [shape = 's32[1]{0}', space=sflag, size = 0x4, scoped, tag = 'scoped memory for tpu_custom_call.1']
    #allocation5 [shape = 's32[1]{0}', space=sflag, size = 0x4, scoped, tag = 'scoped memory for tpu_custom_call.1']
    #allocation6 [shape = 'u8[8192]{0}', space=vmem, size = 0x2000, scoped, tag = 'input window, operand 1, single buffered']
    #allocation7 [shape = 's32[1]{0}', space=sflag, size = 0x4, scoped, tag = 'scoped memory for tpu_custom_call.1']
    #allocation8 [shape = 'u8[4096]{0}', space=vmem, size = 0x1000, scoped, tag = 'output window, operand 0, single buffered']
    %7 = vsyncpa [#allocation4], 0
    %8 = vsyncpa [#allocation7], 0
    %9 = vsyncpa [#allocation5], 0
    // Predicated region
    $region2: #{tpu_custom_call.1} parent=1 // pred_check
      _
    $region3: #{tpu_custom_call.1} parent=1 // pred_check_branch
      %11 = sbr.rel (0) target = $region5
    $region4: #{tpu_custom_call.1} parent=1 // pred_region
      %s13 = ssub.s32 256, 256
      %14 = vsyncadd [#allocation4], %s13
      %s15 = sshll.u32 [#allocation3], 4
      %s16 = int_to_ptr.vmem [resolvable:$true] %s15
      %21 = dma.hbm_to_vmem [thread:$0]  %s0, 256, %s16, [#allocation4], 128, 128, 8
    $region5: #{tpu_custom_call.1} parent=1 // pred_fallthru
      _
    // Predicated region
    $region6: #{tpu_custom_call.1} parent=1 // pred_check
      _
    $region7: #{tpu_custom_call.1} parent=1 // pred_check_branch
      %23 = sbr.rel (0) target = $region9
    $region8: #{tpu_custom_call.1} parent=1 // pred_region
      %s25 = ssub.s32 256, 256
      %26 = vsyncadd [#allocation7], %s25
      %s27 = sshll.u32 [#allocation6], 4
      %s28 = int_to_ptr.vmem [resolvable:$true] %s27
      %33 = dma.hbm_to_vmem [thread:$0]  %s1, 256, %s28, [#allocation7], 128, 128, 8
    $region9: #{tpu_custom_call.1} parent=1 // pred_fallthru
      _
    // Predicated region
    $region10: #{tpu_custom_call.1} parent=1 // pred_check
      _
    $region11: #{tpu_custom_call.1} parent=1 // pred_check_branch
      %35 = sbr.rel (0) target = $region13
    $region12: #{tpu_custom_call.1} parent=1 // pred_region
      %36 = dma.done [#allocation4], 256
    $region13: #{tpu_custom_call.1} parent=1 // pred_fallthru
      _
    // Predicated region
    $region14: #{tpu_custom_call.1} parent=1 // pred_check
      _
    $region15: #{tpu_custom_call.1} parent=1 // pred_check_branch
      %38 = sbr.rel (0) target = $region17
    $region16: #{tpu_custom_call.1} parent=1 // pred_region
      %39 = dma.done [#allocation7], 256
    $region17: #{tpu_custom_call.1} parent=1 // pred_fallthru
      _
    %v40 = vld [vmem:[#allocation3] sm:$0xff]
    %v41 = vld [vmem:[#allocation3 + $0x8] sm:$0xff]
    %v42 = vld [vmem:[#allocation6] sm:$0xff]
    %v43 = vld [vmem:[#allocation6 + $0x8] sm:$0xff]
    %44 = vst [vmem:[#allocation2] sm:$0xff] 0.0
    %45 = vst [vmem:[#allocation2 + $0x8] sm:$0xff] 0.0
    %46 = vst [vmem:[#allocation2 + $0x10] sm:$0xff] 0.0
    %47 = vst [vmem:[#allocation2 + $0x18] sm:$0xff] 0.0
    %v48 = vmul.f32 %v40, %v40
    %v49 = vmul.f32 %v41, %v41
    %vm50 = vcmask 130048
    %v51 = vsel %vm50, %v48, 0.0
    %52 = vadd.xlane.f32.xlu0 %v51
    %v53 = vpop.xlane.xlu0 %52
    %v54 = vsel %vm50, %v49, 0.0
    %55 = vadd.xlane.f32.xlu0 %v54
    %v56 = vpop.xlane.xlu0 %55
    %v57 = vlaneseq
    %v58 = vand.u32 %v57, 127
    %v59 = vsub.s32 %v58, 1
    %v60 = vand.u32 %v59, 1
    %vm61 = vcmp.eq.s32.totalorder %v60, 1
    %v62 = vshra.s32 %v59, 1
    %v63 = vand.u32 %v62, 1
    %vm64 = vcmp.eq.s32.totalorder %v63, 1
    %v65 = vshra.s32 %v59, 2
    %v66 = vand.u32 %v65, 1
    %vm67 = vcmp.eq.s32.totalorder %v66, 1
    %v69 = vsel %vm50, %v42, 0
    %v72 = vsel %vm50, %v40, 0
    %74 = vmatprep.subr.mxu0 0.0
    %75 = vmatpush1.xpose.msra.mxu0 0.0
    %76 = vmatprep.subr.mxu0 0.0
    %77 = vmatpush1.xpose.msra.mxu0 0.0
    %78 = vmatprep.subr.mxu0 0.0
    %79 = vmatpush1.xpose.msra.mxu0 0.0
    %80 = vmatprep.subr.mxu0 0.0
    %81 = vmatpush1.xpose.msra.mxu0 0.0
    %82 = vmatprep.subr.mxu0 0.0
    %83 = vmatpush1.xpose.msra.mxu0 0.0
    %84 = vmatprep.subr.mxu0 0.0
    %85 = vmatpush1.xpose.msra.mxu0 0.0
    %86 = vmatprep.subr.mxu0 0.0
    %87 = vmatpush1.xpose.msra.mxu0 0.0
    %88 = vmatprep.subr.mxu0 0.0
    %89 = vmatpush1.xpose.msra.mxu0 0.0
    %90 = vmatprep.subr.mxu0 0.0
    %91 = vmatpush1.xpose.msra.mxu0 0.0
    %92 = vmatprep.subr.mxu0 0.0
    %93 = vmatpush1.xpose.msra.mxu0 0.0
    %94 = vmatprep.subr.mxu0 0.0
    %95 = vmatpush1.xpose.msra.mxu0 0.0
    %96 = vmatprep.subr.mxu0 0.0
    %97 = vmatpush1.xpose.msra.mxu0 0.0
    %98 = vmatprep.subr.mxu0 0.0
    %99 = vmatpush1.xpose.msra.mxu0 0.0
    %100 = vmatprep.subr.mxu0 0.0
    %101 = vmatpush1.xpose.msra.mxu0 0.0
    %102 = vmatprep.subr.mxu0 0.0
    %103 = vmatpush1.xpose.msra.mxu0 0.0
    %104 = vmatprep.subr.mxu0 0.0
    %105 = vmatpush1.xpose.msra.mxu0 %v72
    %106 = vmatprep.subr.mxu0 0.0
    %107 = vmatpush2.xpose.msra.mxu0 0.0
    %108 = vmatprep.subr.mxu0 0.0
    %109 = vmatpush2.xpose.msra.mxu0 0.0
    %110 = vmatprep.subr.mxu0 0.0
    %111 = vmatpush2.xpose.msra.mxu0 0.0
    %112 = vmatprep.subr.mxu0 0.0
    %113 = vmatpush2.xpose.msra.mxu0 0.0
    %114 = vmatprep.subr.mxu0 0.0
    %115 = vmatpush2.xpose.msra.mxu0 0.0
    %116 = vmatprep.subr.mxu0 0.0
    %117 = vmatpush2.xpose.msra.mxu0 0.0
    %118 = vmatprep.subr.mxu0 0.0
    %119 = vmatpush2.xpose.msra.mxu0 0.0
    %120 = vmatprep.subr.mxu0 0.0
    %121 = vmatpush2.xpose.msra.mxu0 0.0
    %122 = vmatprep.subr.mxu0 0.0
    %123 = vmatpush2.xpose.msra.mxu0 0.0
    %124 = vmatprep.subr.mxu0 0.0
    %125 = vmatpush2.xpose.msra.mxu0 0.0
    %126 = vmatprep.subr.mxu0 0.0
    %127 = vmatpush2.xpose.msra.mxu0 0.0
    %128 = vmatprep.subr.mxu0 0.0
    %129 = vmatpush2.xpose.msra.mxu0 0.0
    %130 = vmatprep.subr.mxu0 0.0
    %131 = vmatpush2.xpose.msra.mxu0 0.0
    %132 = vmatprep.subr.mxu0 0.0
    %133 = vmatpush2.xpose.msra.mxu0 0.0
    %134 = vmatprep.subr.mxu0 0.0
    %135 = vmatpush2.xpose.msra.mxu0 0.0
    %136 = vmatprep.subr.mxu0 0.0
    %137 = vmatpush2.xpose.msra.mxu0 0.0
    %138 = vmatprep.mubr.f32.mxu0 0.0
    %139 = vmatmul.mubr.f32.gmra.mxu0 %v69
    %v140 = vpop.f32.mrf.mxu0
    %v141 = vadd.f32 0.0, %v140
    %v142 = vpop.f32.mrf.mxu0
    %143 = vdwg.mxu0
    %v144 = vmul.f32 %v42, %v42
    %v145 = vsel %vm50, %v144, 0.0
    %146 = vadd.xlane.f32.xlu0 %v145
    %v147 = vpop.xlane.xlu0 %146
    %v148 = vmul.f32 %v141, 2.0
    %v150 = vlaneseq
    %v151 = vshrl.u32 %v150, 7
    %v152 = vsub.s32 0, %v151
    %v153 = vrot.slane %v148, %v152
    %155 = vbcast.lane.b32.xlu0 %v153, 256
    %v156 = vpop.permute.xlu0 %155
    %v157 = vlaneseq
    %v158 = vshrl.u32 %v157, 7
    %v159 = vsub.s32 1, %v158
    %v160 = vrot.slane %v148, %v159
    %162 = vbcast.lane.b32.xlu0 %v160, 256
    %v163 = vpop.permute.xlu0 %162
    %v164 = vlaneseq
    %v165 = vshrl.u32 %v164, 7
    %v166 = vsub.s32 2, %v165
    %v167 = vrot.slane %v148, %v166
    %169 = vbcast.lane.b32.xlu0 %v167, 256
    %v170 = vpop.permute.xlu0 %169
    %v171 = vlaneseq
    %v172 = vshrl.u32 %v171, 7
    %v173 = vsub.s32 3, %v172
    %v174 = vrot.slane %v148, %v173
    %176 = vbcast.lane.b32.xlu0 %v174, 256
    %v177 = vpop.permute.xlu0 %176
    %v178 = vlaneseq
    %v179 = vshrl.u32 %v178, 7
    %v180 = vsub.s32 4, %v179
    %v181 = vrot.slane %v148, %v180
    %183 = vbcast.lane.b32.xlu0 %v181, 256
    %v184 = vpop.permute.xlu0 %183
    %v185 = vlaneseq
    %v186 = vshrl.u32 %v185, 7
    %v187 = vsub.s32 5, %v186
    %v188 = vrot.slane %v148, %v187
    %190 = vbcast.lane.b32.xlu0 %v188, 256
    %v191 = vpop.permute.xlu0 %190
    %v192 = vlaneseq
    %v193 = vshrl.u32 %v192, 7
    %v194 = vsub.s32 6, %v193
    %v195 = vrot.slane %v148, %v194
    %197 = vbcast.lane.b32.xlu0 %v195, 256
    %v198 = vpop.permute.xlu0 %197
    %v199 = vlaneseq
    %v200 = vshrl.u32 %v199, 7
    %v201 = vsub.s32 7, %v200
    %v202 = vrot.slane %v148, %v201
    %204 = vbcast.lane.b32.xlu0 %v202, 256
    %v205 = vpop.permute.xlu0 %204
    %v214 = vsub.f32 %v53, %v156
    %v215 = vsub.f32 %v53, %v163
    %v216 = vsub.f32 %v53, %v170
    %v217 = vsub.f32 %v53, %v177
    %v218 = vsub.f32 %v53, %v184
    %v219 = vsub.f32 %v53, %v191
    %v220 = vsub.f32 %v53, %v198
    %v221 = vsub.f32 %v53, %v205
    %v223 = vlaneseq
    %v224 = vshrl.u32 %v223, 7
    %v225 = vsub.s32 0, %v224
    %v226 = vrot.slane %v147, %v225
    %v227 = vlaneseq
    %v228 = vshrl.u32 %v227, 7
    %v229 = vsub.s32 1, %v228
    %v230 = vrot.slane %v147, %v229
    %v231 = vlaneseq
    %v232 = vshrl.u32 %v231, 7
    %v233 = vsub.s32 2, %v232
    %v234 = vrot.slane %v147, %v233
    %v235 = vlaneseq
    %v236 = vshrl.u32 %v235, 7
    %v237 = vsub.s32 3, %v236
    %v238 = vrot.slane %v147, %v237
    %v239 = vlaneseq
    %v240 = vshrl.u32 %v239, 7
    %v241 = vsub.s32 4, %v240
    %v242 = vrot.slane %v147, %v241
    %v243 = vlaneseq
    %v244 = vshrl.u32 %v243, 7
    %v245 = vsub.s32 5, %v244
    %v246 = vrot.slane %v147, %v245
    %v247 = vlaneseq
    %v248 = vshrl.u32 %v247, 7
    %v249 = vsub.s32 6, %v248
    %v250 = vrot.slane %v147, %v249
    %v251 = vlaneseq
    %v252 = vshrl.u32 %v251, 7
    %v253 = vsub.s32 7, %v252
    %v254 = vrot.slane %v147, %v253
    %v263 = vadd.f32 %v214, %v226
    %v264 = vadd.f32 %v215, %v230
    %v265 = vadd.f32 %v216, %v234
    %v266 = vadd.f32 %v217, %v238
    %v267 = vadd.f32 %v218, %v242
    %v268 = vadd.f32 %v219, %v246
    %v269 = vadd.f32 %v220, %v250
    %v270 = vadd.f32 %v221, %v254
    %279 = vset.pattern.permute.xlu0 0
    %280 = vperm.xlu0 %279, %v263
    %v281 = vpop.permute.xlu0 %280
    %282 = vset.pattern.permute.xlu0 0
    %283 = vperm.xlu0 %282, %v264
    %v284 = vpop.permute.xlu0 %283
    %285 = vset.pattern.permute.xlu0 0
    %286 = vperm.xlu0 %285, %v265
    %v287 = vpop.permute.xlu0 %286
    %288 = vset.pattern.permute.xlu0 0
    %289 = vperm.xlu0 %288, %v266
    %v290 = vpop.permute.xlu0 %289
    %291 = vset.pattern.permute.xlu0 0
    %292 = vperm.xlu0 %291, %v267
    %v293 = vpop.permute.xlu0 %292
    %294 = vset.pattern.permute.xlu0 0
    %295 = vperm.xlu0 %294, %v268
    %v296 = vpop.permute.xlu0 %295
    %297 = vset.pattern.permute.xlu0 0
    %298 = vperm.xlu0 %297, %v269
    %v299 = vpop.permute.xlu0 %298
    %300 = vset.pattern.permute.xlu0 0
    %301 = vperm.xlu0 %300, %v270
    %v302 = vpop.permute.xlu0 %301
    %v303 = vlaneseq
    %v304 = vshrl.u32 %v303, 7
    %v305 = vsub.s32 %v58, %v304
    %v306 = vrot.slane %v281, %v305
    %v307 = vlaneseq
    %v308 = vshrl.u32 %v307, 7
    %v309 = vsub.s32 %v58, %v308
    %v310 = vrot.slane %v284, %v309
    %v311 = vlaneseq
    %v312 = vshrl.u32 %v311, 7
    %v313 = vsub.s32 %v58, %v312
    %v314 = vrot.slane %v287, %v313
    %v315 = vlaneseq
    %v316 = vshrl.u32 %v315, 7
    %v317 = vsub.s32 %v58, %v316
    %v318 = vrot.slane %v290, %v317
    %v319 = vlaneseq
    %v320 = vshrl.u32 %v319, 7
    %v321 = vsub.s32 %v58, %v320
    %v322 = vrot.slane %v293, %v321
    %v323 = vlaneseq
    %v324 = vshrl.u32 %v323, 7
    %v325 = vsub.s32 %v58, %v324
    %v326 = vrot.slane %v296, %v325
    %v327 = vlaneseq
    %v328 = vshrl.u32 %v327, 7
    %v329 = vsub.s32 %v58, %v328
    %v330 = vrot.slane %v299, %v329
    %v331 = vlaneseq
    %v332 = vshrl.u32 %v331, 7
    %v333 = vsub.s32 %v58, %v332
    %v334 = vrot.slane %v302, %v333
    %vm335 = vcmask 1041409
    %v336 = vsel %vm335, %v310, %v306
    %vm337 = vcmask 1042434
    %v338 = vsel %vm337, %v314, %v336
    %vm339 = vcmask 1043459
    %v340 = vsel %vm339, %v318, %v338
    %vm341 = vcmask 1044484
    %v342 = vsel %vm341, %v322, %v340
    %vm343 = vcmask 1045509
    %v344 = vsel %vm343, %v326, %v342
    %vm345 = vcmask 1046534
    %v346 = vsel %vm345, %v330, %v344
    %vm347 = vcmask 1047559
    %v348 = vsel %vm347, %v334, %v346
    %vm350 = vcmask 64512
    %351 = vst.msk [vmem:[#allocation2] sm:$0xff] %vm350, %v348
    %v352 = vld [vmem:[#allocation2] sm:$0xff]
    %v353 = vld [vmem:[#allocation2 + $0x8] sm:$0xff]
    %354 = vrot.lane.b32.xlu0 %v352, 1
    %v355 = vpop.permute.xlu0 %354
    %356 = vrot.lane.b32.xlu0 %v353, 1
    %v357 = vpop.permute.xlu0 %356
    %v358 = vrot.slane %v355, 7
    %v359 = vrot.slane %v357, 7
    %v360 = vlaneseq
    %v361 = vshrl.u32 %v360, 7
    %vm362 = vcmp.lt.s32.totalorder %v361, 1
    %v363 = vsel %vm362, %v358, %v359
    %v364 = vsel %vm362, %v359, %v358
    %v365 = vsel %vm61, %v364, %v355
    %v366 = vsel %vm61, %v363, %v357
    %v367 = vrot.slane %v365, 6
    %v368 = vrot.slane %v366, 6
    %vm369 = vcmp.lt.s32.totalorder %v361, 2
    %v370 = vsel %vm369, %v367, %v368
    %v371 = vsel %vm369, %v368, %v367
    %v372 = vsel %vm64, %v371, %v365
    %v373 = vsel %vm64, %v370, %v366
    %v374 = vrot.slane %v372, 4
    %v375 = vrot.slane %v373, 4
    %vm376 = vcmp.lt.s32.totalorder %v361, 4
    %v377 = vsel %vm376, %v374, %v375
    %v378 = vsel %vm376, %v375, %v374
    %v379 = vsel %vm67, %v378, %v372
    %v380 = vsel %vm67, %v377, %v373
    %381 = vst [vmem:[#allocation2] sm:$0xff] %v379
    %382 = vst [vmem:[#allocation2 + $0x8] sm:$0xff] %v380
    %v384 = vsel %vm50, %v43, 0
    %v387 = vsel %vm50, %v41, 0
    %389 = vmatprep.subr.mxu0 0.0
    %390 = vmatpush1.xpose.msra.mxu0 0.0
    %391 = vmatprep.subr.mxu0 0.0
    %392 = vmatpush1.xpose.msra.mxu0 0.0
    %393 = vmatprep.subr.mxu0 0.0
    %394 = vmatpush1.xpose.msra.mxu0 0.0
    %395 = vmatprep.subr.mxu0 0.0
    %396 = vmatpush1.xpose.msra.mxu0 0.0
    %397 = vmatprep.subr.mxu0 0.0
    %398 = vmatpush1.xpose.msra.mxu0 0.0
    %399 = vmatprep.subr.mxu0 0.0
    %400 = vmatpush1.xpose.msra.mxu0 0.0
    %401 = vmatprep.subr.mxu0 0.0
    %402 = vmatpush1.xpose.msra.mxu0 0.0
    %403 = vmatprep.subr.mxu0 0.0
    %404 = vmatpush1.xpose.msra.mxu0 0.0
    %405 = vmatprep.subr.mxu0 0.0
    %406 = vmatpush1.xpose.msra.mxu0 0.0
    %407 = vmatprep.subr.mxu0 0.0
    %408 = vmatpush1.xpose.msra.mxu0 0.0
    %409 = vmatprep.subr.mxu0 0.0
    %410 = vmatpush1.xpose.msra.mxu0 0.0
    %411 = vmatprep.subr.mxu0 0.0
    %412 = vmatpush1.xpose.msra.mxu0 0.0
    %413 = vmatprep.subr.mxu0 0.0
    %414 = vmatpush1.xpose.msra.mxu0 0.0
    %415 = vmatprep.subr.mxu0 0.0
    %416 = vmatpush1.xpose.msra.mxu0 0.0
    %417 = vmatprep.subr.mxu0 0.0
    %418 = vmatpush1.xpose.msra.mxu0 0.0
    %419 = vmatprep.subr.mxu0 0.0
    %420 = vmatpush1.xpose.msra.mxu0 %v387
    %421 = vmatprep.subr.mxu0 0.0
    %422 = vmatpush2.xpose.msra.mxu0 0.0
    %423 = vmatprep.subr.mxu0 0.0
    %424 = vmatpush2.xpose.msra.mxu0 0.0
    %425 = vmatprep.subr.mxu0 0.0
    %426 = vmatpush2.xpose.msra.mxu0 0.0
    %427 = vmatprep.subr.mxu0 0.0
    %428 = vmatpush2.xpose.msra.mxu0 0.0
    %429 = vmatprep.subr.mxu0 0.0
    %430 = vmatpush2.xpose.msra.mxu0 0.0
    %431 = vmatprep.subr.mxu0 0.0
    %432 = vmatpush2.xpose.msra.mxu0 0.0
    %433 = vmatprep.subr.mxu0 0.0
    %434 = vmatpush2.xpose.msra.mxu0 0.0
    %435 = vmatprep.subr.mxu0 0.0
    %436 = vmatpush2.xpose.msra.mxu0 0.0
    %437 = vmatprep.subr.mxu0 0.0
    %438 = vmatpush2.xpose.msra.mxu0 0.0
    %439 = vmatprep.subr.mxu0 0.0
    %440 = vmatpush2.xpose.msra.mxu0 0.0
    %441 = vmatprep.subr.mxu0 0.0
    %442 = vmatpush2.xpose.msra.mxu0 0.0
    %443 = vmatprep.subr.mxu0 0.0
    %444 = vmatpush2.xpose.msra.mxu0 0.0
    %445 = vmatprep.subr.mxu0 0.0
    %446 = vmatpush2.xpose.msra.mxu0 0.0
    %447 = vmatprep.subr.mxu0 0.0
    %448 = vmatpush2.xpose.msra.mxu0 0.0
    %449 = vmatprep.subr.mxu0 0.0
    %450 = vmatpush2.xpose.msra.mxu0 0.0
    %451 = vmatprep.subr.mxu0 0.0
    %452 = vmatpush2.xpose.msra.mxu0 0.0
    %453 = vmatprep.mubr.f32.mxu0 0.0
    %454 = vmatmul.mubr.f32.gmra.mxu0 %v384
    %v455 = vpop.f32.mrf.mxu0
    %v456 = vadd.f32 0.0, %v455
    %v457 = vpop.f32.mrf.mxu0
    %458 = vdwg.mxu0
    %v459 = vmul.f32 %v43, %v43
    %v460 = vsel %vm50, %v459, 0.0
    %461 = vadd.xlane.f32.xlu0 %v460
    %v462 = vpop.xlane.xlu0 %461
    %v463 = vmul.f32 %v456, 2.0
    %v465 = vlaneseq
    %v466 = vshrl.u32 %v465, 7
    %v467 = vsub.s32 0, %v466
    %v468 = vrot.slane %v463, %v467
    %470 = vbcast.lane.b32.xlu0 %v468, 256
    %v471 = vpop.permute.xlu0 %470
    %v472 = vlaneseq
    %v473 = vshrl.u32 %v472, 7
    %v474 = vsub.s32 1, %v473
    %v475 = vrot.slane %v463, %v474
    %477 = vbcast.lane.b32.xlu0 %v475, 256
    %v478 = vpop.permute.xlu0 %477
    %v479 = vlaneseq
    %v480 = vshrl.u32 %v479, 7
    %v481 = vsub.s32 2, %v480
    %v482 = vrot.slane %v463, %v481
    %484 = vbcast.lane.b32.xlu0 %v482, 256
    %v485 = vpop.permute.xlu0 %484
    %v486 = vlaneseq
    %v487 = vshrl.u32 %v486, 7
    %v488 = vsub.s32 3, %v487
    %v489 = vrot.slane %v463, %v488
    %491 = vbcast.lane.b32.xlu0 %v489, 256
    %v492 = vpop.permute.xlu0 %491
    %v493 = vlaneseq
    %v494 = vshrl.u32 %v493, 7
    %v495 = vsub.s32 4, %v494
    %v496 = vrot.slane %v463, %v495
    %498 = vbcast.lane.b32.xlu0 %v496, 256
    %v499 = vpop.permute.xlu0 %498
    %v500 = vlaneseq
    %v501 = vshrl.u32 %v500, 7
    %v502 = vsub.s32 5, %v501
    %v503 = vrot.slane %v463, %v502
    %505 = vbcast.lane.b32.xlu0 %v503, 256
    %v506 = vpop.permute.xlu0 %505
    %v507 = vlaneseq
    %v508 = vshrl.u32 %v507, 7
    %v509 = vsub.s32 6, %v508
    %v510 = vrot.slane %v463, %v509
    %512 = vbcast.lane.b32.xlu0 %v510, 256
    %v513 = vpop.permute.xlu0 %512
    %v514 = vlaneseq
    %v515 = vshrl.u32 %v514, 7
    %v516 = vsub.s32 7, %v515
    %v517 = vrot.slane %v463, %v516
    %519 = vbcast.lane.b32.xlu0 %v517, 256
    %v520 = vpop.permute.xlu0 %519
    %v529 = vsub.f32 %v56, %v471
    %v530 = vsub.f32 %v56, %v478
    %v531 = vsub.f32 %v56, %v485
    %v532 = vsub.f32 %v56, %v492
    %v533 = vsub.f32 %v56, %v499
    %v534 = vsub.f32 %v56, %v506
    %v535 = vsub.f32 %v56, %v513
    %v536 = vsub.f32 %v56, %v520
    %v538 = vlaneseq
    %v539 = vshrl.u32 %v538, 7
    %v540 = vsub.s32 0, %v539
    %v541 = vrot.slane %v462, %v540
    %v542 = vlaneseq
    %v543 = vshrl.u32 %v542, 7
    %v544 = vsub.s32 1, %v543
    %v545 = vrot.slane %v462, %v544
    %v546 = vlaneseq
    %v547 = vshrl.u32 %v546, 7
    %v548 = vsub.s32 2, %v547
    %v549 = vrot.slane %v462, %v548
    %v550 = vlaneseq
    %v551 = vshrl.u32 %v550, 7
    %v552 = vsub.s32 3, %v551
    %v553 = vrot.slane %v462, %v552
    %v554 = vlaneseq
    %v555 = vshrl.u32 %v554, 7
    %v556 = vsub.s32 4, %v555
    %v557 = vrot.slane %v462, %v556
    %v558 = vlaneseq
    %v559 = vshrl.u32 %v558, 7
    %v560 = vsub.s32 5, %v559
    %v561 = vrot.slane %v462, %v560
    %v562 = vlaneseq
    %v563 = vshrl.u32 %v562, 7
    %v564 = vsub.s32 6, %v563
    %v565 = vrot.slane %v462, %v564
    %v566 = vlaneseq
    %v567 = vshrl.u32 %v566, 7
    %v568 = vsub.s32 7, %v567
    %v569 = vrot.slane %v462, %v568
    %v578 = vadd.f32 %v529, %v541
    %v579 = vadd.f32 %v530, %v545
    %v580 = vadd.f32 %v531, %v549
    %v581 = vadd.f32 %v532, %v553
    %v582 = vadd.f32 %v533, %v557
    %v583 = vadd.f32 %v534, %v561
    %v584 = vadd.f32 %v535, %v565
    %v585 = vadd.f32 %v536, %v569
    %594 = vset.pattern.permute.xlu0 0
    %595 = vperm.xlu0 %594, %v578
    %v596 = vpop.permute.xlu0 %595
    %597 = vset.pattern.permute.xlu0 0
    %598 = vperm.xlu0 %597, %v579
    %v599 = vpop.permute.xlu0 %598
    %600 = vset.pattern.permute.xlu0 0
    %601 = vperm.xlu0 %600, %v580
    %v602 = vpop.permute.xlu0 %601
    %603 = vset.pattern.permute.xlu0 0
    %604 = vperm.xlu0 %603, %v581
    %v605 = vpop.permute.xlu0 %604
    %606 = vset.pattern.permute.xlu0 0
    %607 = vperm.xlu0 %606, %v582
    %v608 = vpop.permute.xlu0 %607
    %609 = vset.pattern.permute.xlu0 0
    %610 = vperm.xlu0 %609, %v583
    %v611 = vpop.permute.xlu0 %610
    %612 = vset.pattern.permute.xlu0 0
    %613 = vperm.xlu0 %612, %v584
    %v614 = vpop.permute.xlu0 %613
    %615 = vset.pattern.permute.xlu0 0
    %616 = vperm.xlu0 %615, %v585
    %v617 = vpop.permute.xlu0 %616
    %v618 = vlaneseq
    %v619 = vshrl.u32 %v618, 7
    %v620 = vsub.s32 %v58, %v619
    %v621 = vrot.slane %v596, %v620
    %v622 = vlaneseq
    %v623 = vshrl.u32 %v622, 7
    %v624 = vsub.s32 %v58, %v623
    %v625 = vrot.slane %v599, %v624
    %v626 = vlaneseq
    %v627 = vshrl.u32 %v626, 7
    %v628 = vsub.s32 %v58, %v627
    %v629 = vrot.slane %v602, %v628
    %v630 = vlaneseq
    %v631 = vshrl.u32 %v630, 7
    %v632 = vsub.s32 %v58, %v631
    %v633 = vrot.slane %v605, %v632
    %v634 = vlaneseq
    %v635 = vshrl.u32 %v634, 7
    %v636 = vsub.s32 %v58, %v635
    %v637 = vrot.slane %v608, %v636
    %v638 = vlaneseq
    %v639 = vshrl.u32 %v638, 7
    %v640 = vsub.s32 %v58, %v639
    %v641 = vrot.slane %v611, %v640
    %v642 = vlaneseq
    %v643 = vshrl.u32 %v642, 7
    %v644 = vsub.s32 %v58, %v643
    %v645 = vrot.slane %v614, %v644
    %v646 = vlaneseq
    %v647 = vshrl.u32 %v646, 7
    %v648 = vsub.s32 %v58, %v647
    %v649 = vrot.slane %v617, %v648
    %v650 = vsel %vm335, %v625, %v621
    %v651 = vsel %vm337, %v629, %v650
    %v652 = vsel %vm339, %v633, %v651
    %v653 = vsel %vm341, %v637, %v652
    %v654 = vsel %vm343, %v641, %v653
    %v655 = vsel %vm345, %v645, %v654
    %v656 = vsel %vm347, %v649, %v655
    %s658 = scalar_lea.vmem [#allocation2], 16
    %659 = vst.msk [vmem:[%s658] sm:$0xff] %vm350, %v656
    %v660 = vld [vmem:[%s658] sm:$0xff]
    %v661 = vld [vmem:[%s658 + $0x8] sm:$0xff]
    %662 = vrot.lane.b32.xlu0 %v660, 1
    %v663 = vpop.permute.xlu0 %662
    %664 = vrot.lane.b32.xlu0 %v661, 1
    %v665 = vpop.permute.xlu0 %664
    %v666 = vrot.slane %v663, 7
    %v667 = vrot.slane %v665, 7
    %v668 = vsel %vm362, %v666, %v667
    %v669 = vsel %vm362, %v667, %v666
    %v670 = vsel %vm61, %v669, %v663
    %v671 = vsel %vm61, %v668, %v665
    %v672 = vrot.slane %v670, 6
    %v673 = vrot.slane %v671, 6
    %v674 = vsel %vm369, %v672, %v673
    %v675 = vsel %vm369, %v673, %v672
    %v676 = vsel %vm64, %v675, %v670
    %v677 = vsel %vm64, %v674, %v671
    %v678 = vrot.slane %v676, 4
    %v679 = vrot.slane %v677, 4
    %v680 = vsel %vm376, %v678, %v679
    %v681 = vsel %vm376, %v679, %v678
    %v682 = vsel %vm67, %v681, %v676
    %v683 = vsel %vm67, %v680, %v677
    %684 = vst [vmem:[%s658] sm:$0xff] %v682
    %685 = vst [vmem:[%s658 + $0x8] sm:$0xff] %v683
    %vm686 = vcmp.eq.s32.totalorder %v58, 1
    %v687 = vsel %vm686, 0.0, inf
    loop: start=0, step=1, limit=2
    $region18: #{tpu_custom_call.1} parent=1 // loop_pre_header
      _
    $region19: #{tpu_custom_call.1} parent=1 // loop_header
      %s689 = sphi 0, %s693
      %p690 = scmp.ge.s32.totalorder %s689, 2
      %v694 = vphi inf, %v1024
      %v695 = vphi inf, %v1040
      %v696 = vphi %v687, %v998
      %v697 = vphi -inf, %v1027
      %v698 = vphi 0.0, %v1038
    $region20: #{tpu_custom_call.1} parent=1 // loop_header_branch
      %692 = sbr.rel (%p690) target = $region24
    $region21: #{tpu_custom_call.1} parent=1 // loop_body
      %s699 = smul.u32 %s689, 8
      %s700 = scalar_lea.vmem [#allocation2], %s699
      %v701 = vld [vmem:[%s700] sm:$0xff]
      %v702 = vld [vmem:[%s700 + $0x10] sm:$0xff]
      %v703 = vmin.f32 %v696, %v695
      %v704 = vmin.f32 %v703, %v694
      %v706 = vrot.slane %v704, 1
      %v709 = vadd.f32 %v701, %v704
      %v710 = vadd.f32 %v702, %v706
      %s711 = sadd.s32 %s699, 4294967290
      %p712 = scmp.gt.s32.totalorder %s711, 1
      %s713 = scalar_select %p712, %s711, 1
      %s714 = sadd.s32 %s699, 1
      %p715 = scmp.lt.s32.totalorder %s714, 8
      %s716 = scalar_select %p715, %s714, 8
      %v717 = vstv %s713
      %vm718 = vcmp.ge.s32.totalorder %v58, %v717
      %v719 = vstv %s716
      %vm720 = vcmp.le.s32.totalorder %v58, %v719
      %vm721 = vmand %vm718, %vm720
      %v724 = vrot.slane %v710, 7
      %v725 = vsel %vm335, %v724, %v709
      %v727 = vsel %vm721, %v725, inf
      %v728 = vsub.f32 0.0, %v727
      %v729 = vmax.f32 %v697, %v728
      %v730 = vsel %vm721, %v729, %v697
      %v731 = vmin.f32 %v728, %v697
      %v732 = vsub.f32 %v731, %v730
      %v733 = vsel %vm721, %v732, 0.0
      %v734 = vmul.f32 %v733, 1.442695
      %v735 = vpow.pop %v734
      %vm736 = vcmp.gt.f32.partialorder %v728, %v697
      %v737 = vmul.f32 %v698, %v735
      %v738 = vadd.f32 %v737, 1.0
      %v739 = vadd.f32 %v698, %v735
      %v740 = vsel %vm736, %v738, %v739
      %v741 = vsel %vm721, %v740, %v698
      %742 = vrot.lane.b32.xlu0 %v727, 1
      %v743 = vpop.permute.xlu0 %742
      %s744 = sadd.s32 %s699, 2
      %v745 = vmin.f32 %v695, %v743
      %v746 = vmin.f32 %v745, %v727
      %v748 = vrot.slane %v746, 7
      %v751 = vadd.f32 %v701, %v748
      %v752 = vadd.f32 %v702, %v746
      %s753 = sadd.s32 %s699, 4294967291
      %p754 = scmp.gt.s32.totalorder %s753, 1
      %s755 = scalar_select %p754, %s753, 1
      %p756 = scmp.lt.s32.totalorder %s744, 8
      %s757 = scalar_select %p756, %s744, 8
      %v758 = vstv %s755
      %vm759 = vcmp.ge.s32.totalorder %v58, %v758
      %v760 = vstv %s757
      %vm761 = vcmp.le.s32.totalorder %v58, %v760
      %vm762 = vmand %vm759, %vm761
      %v765 = vrot.slane %v751, 1
      %v766 = vsel %vm335, %v752, %v765
      %v768 = vsel %vm762, %v766, inf
      %v769 = vsub.f32 0.0, %v768
      %v770 = vmax.f32 %v730, %v769
      %v771 = vsel %vm762, %v770, %v730
      %v772 = vmin.f32 %v769, %v730
      %v773 = vsub.f32 %v772, %v771
      %v774 = vsel %vm762, %v773, 0.0
      %v775 = vmul.f32 %v774, 1.442695
      %v776 = vpow.pop %v775
      %vm777 = vcmp.gt.f32.partialorder %v769, %v730
      %v778 = vmul.f32 %v741, %v776
      %v779 = vadd.f32 %v778, 1.0
      %v780 = vadd.f32 %v741, %v776
      %v781 = vsel %vm777, %v779, %v780
      %v782 = vsel %vm762, %v781, %v741
      %783 = vrot.lane.b32.xlu0 %v768, 1
      %v784 = vpop.permute.xlu0 %783
      %v785 = vmin.f32 %v743, %v784
      %v786 = vmin.f32 %v785, %v768
      %v788 = vrot.slane %v786, 6
      %v789 = vrot.slane %v786, 7
      %v792 = vadd.f32 %v701, %v788
      %v793 = vadd.f32 %v702, %v789
      %s794 = sadd.s32 %s699, 4294967292
      %p795 = scmp.gt.s32.totalorder %s794, 1
      %s796 = scalar_select %p795, %s794, 1
      %s797 = sadd.s32 %s699, 3
      %p798 = scmp.lt.s32.totalorder %s797, 8
      %s799 = scalar_select %p798, %s797, 8
      %v800 = vstv %s796
      %vm801 = vcmp.ge.s32.totalorder %v58, %v800
      %v802 = vstv %s799
      %vm803 = vcmp.le.s32.totalorder %v58, %v802
      %vm804 = vmand %vm801, %vm803
      %v807 = vrot.slane %v792, 2
      %v808 = vrot.slane %v793, 1
      %v809 = vsel %vm335, %v808, %v807
      %v811 = vsel %vm804, %v809, inf
      %v812 = vsub.f32 0.0, %v811
      %v813 = vmax.f32 %v771, %v812
      %v814 = vsel %vm804, %v813, %v771
      %v815 = vmin.f32 %v812, %v771
      %v816 = vsub.f32 %v815, %v814
      %v817 = vsel %vm804, %v816, 0.0
      %v818 = vmul.f32 %v817, 1.442695
      %v819 = vpow.pop %v818
      %vm820 = vcmp.gt.f32.partialorder %v812, %v771
      %v821 = vmul.f32 %v782, %v819
      %v822 = vadd.f32 %v821, 1.0
      %v823 = vadd.f32 %v782, %v819
      %v824 = vsel %vm820, %v822, %v823
      %v825 = vsel %vm804, %v824, %v782
      %826 = vrot.lane.b32.xlu0 %v811, 1
      %v827 = vpop.permute.xlu0 %826
      %v828 = vmin.f32 %v784, %v827
      %v829 = vmin.f32 %v828, %v811
      %v831 = vrot.slane %v829, 5
      %v832 = vrot.slane %v829, 6
      %v835 = vadd.f32 %v701, %v831
      %v836 = vadd.f32 %v702, %v832
      %s837 = sadd.s32 %s699, 4294967293
      %p838 = scmp.gt.s32.totalorder %s837, 1
      %s839 = scalar_select %p838, %s837, 1
      %s840 = sadd.s32 %s699, 4
      %p841 = scmp.lt.s32.totalorder %s840, 8
      %s842 = scalar_select %p841, %s840, 8
      %v843 = vstv %s839
      %vm844 = vcmp.ge.s32.totalorder %v58, %v843
      %v845 = vstv %s842
      %vm846 = vcmp.le.s32.totalorder %v58, %v845
      %vm847 = vmand %vm844, %vm846
      %v850 = vrot.slane %v835, 3
      %v851 = vrot.slane %v836, 2
      %v852 = vsel %vm335, %v851, %v850
      %v854 = vsel %vm847, %v852, inf
      %v855 = vsub.f32 0.0, %v854
      %v856 = vmax.f32 %v814, %v855
      %v857 = vsel %vm847, %v856, %v814
      %v858 = vmin.f32 %v855, %v814
      %v859 = vsub.f32 %v858, %v857
      %v860 = vsel %vm847, %v859, 0.0
      %v861 = vmul.f32 %v860, 1.442695
      %v862 = vpow.pop %v861
      %vm863 = vcmp.gt.f32.partialorder %v855, %v814
      %v864 = vmul.f32 %v825, %v862
      %v865 = vadd.f32 %v864, 1.0
      %v866 = vadd.f32 %v825, %v862
      %v867 = vsel %vm863, %v865, %v866
      %v868 = vsel %vm847, %v867, %v825
      %869 = vrot.lane.b32.xlu0 %v854, 1
      %v870 = vpop.permute.xlu0 %869
      %v871 = vmin.f32 %v827, %v870
      %v872 = vmin.f32 %v871, %v854
      %v874 = vrot.slane %v872, 4
      %v875 = vrot.slane %v872, 5
      %v878 = vadd.f32 %v701, %v874
      %v879 = vadd.f32 %v702, %v875
      %s880 = sadd.s32 %s699, 4294967294
      %p881 = scmp.gt.s32.totalorder %s880, 1
      %s882 = scalar_select %p881, %s880, 1
      %s883 = sadd.s32 %s699, 5
      %p884 = scmp.lt.s32.totalorder %s883, 8
      %s885 = scalar_select %p884, %s883, 8
      %v886 = vstv %s882
      %vm887 = vcmp.ge.s32.totalorder %v58, %v886
      %v888 = vstv %s885
      %vm889 = vcmp.le.s32.totalorder %v58, %v888
      %vm890 = vmand %vm887, %vm889
      %v893 = vrot.slane %v878, 4
      %v894 = vrot.slane %v879, 3
      %v895 = vsel %vm335, %v894, %v893
      %v897 = vsel %vm890, %v895, inf
      %v898 = vsub.f32 0.0, %v897
      %v899 = vmax.f32 %v857, %v898
      %v900 = vsel %vm890, %v899, %v857
      %v901 = vmin.f32 %v898, %v857
      %v902 = vsub.f32 %v901, %v900
      %v903 = vsel %vm890, %v902, 0.0
      %v904 = vmul.f32 %v903, 1.442695
      %v905 = vpow.pop %v904
      %vm906 = vcmp.gt.f32.partialorder %v898, %v857
      %v907 = vmul.f32 %v868, %v905
      %v908 = vadd.f32 %v907, 1.0
      %v909 = vadd.f32 %v868, %v905
      %v910 = vsel %vm906, %v908, %v909
      %v911 = vsel %vm890, %v910, %v868
      %912 = vrot.lane.b32.xlu0 %v897, 1
      %v913 = vpop.permute.xlu0 %912
      %v914 = vmin.f32 %v870, %v913
      %v915 = vmin.f32 %v914, %v897
      %v917 = vrot.slane %v915, 3
      %v918 = vrot.slane %v915, 4
      %v921 = vadd.f32 %v701, %v917
      %v922 = vadd.f32 %v702, %v918
      %s923 = sadd.s32 %s699, 4294967295
      %p924 = scmp.gt.s32.totalorder %s923, 1
      %s925 = scalar_select %p924, %s923, 1
      %s926 = sadd.s32 %s699, 6
      %p927 = scmp.lt.s32.totalorder %s926, 8
      %s928 = scalar_select %p927, %s926, 8
      %v929 = vstv %s925
      %vm930 = vcmp.ge.s32.totalorder %v58, %v929
      %v931 = vstv %s928
      %vm932 = vcmp.le.s32.totalorder %v58, %v931
      %vm933 = vmand %vm930, %vm932
      %v936 = vrot.slane %v921, 5
      %v937 = vrot.slane %v922, 4
      %v938 = vsel %vm335, %v937, %v936
      %v940 = vsel %vm933, %v938, inf
      %v941 = vsub.f32 0.0, %v940
      %v942 = vmax.f32 %v900, %v941
      %v943 = vsel %vm933, %v942, %v900
      %v944 = vmin.f32 %v941, %v900
      %v945 = vsub.f32 %v944, %v943
      %v946 = vsel %vm933, %v945, 0.0
      %v947 = vmul.f32 %v946, 1.442695
      %v948 = vpow.pop %v947
      %vm949 = vcmp.gt.f32.partialorder %v941, %v900
      %v950 = vmul.f32 %v911, %v948
      %v951 = vadd.f32 %v950, 1.0
      %v952 = vadd.f32 %v911, %v948
      %v953 = vsel %vm949, %v951, %v952
      %v954 = vsel %vm933, %v953, %v911
      %955 = vrot.lane.b32.xlu0 %v940, 1
      %v956 = vpop.permute.xlu0 %955
      %v957 = vmin.f32 %v913, %v956
      %v958 = vmin.f32 %v957, %v940
      %v960 = vrot.slane %v958, 2
      %v961 = vrot.slane %v958, 3
      %v964 = vadd.f32 %v701, %v960
      %v965 = vadd.f32 %v702, %v961
      %p966 = scmp.gt.s32.totalorder %s699, 1
      %s967 = scalar_select %p966, %s699, 1
      %s968 = sadd.s32 %s699, 7
      %p969 = scmp.lt.s32.totalorder %s968, 8
      %s970 = scalar_select %p969, %s968, 8
      %v971 = vstv %s967
      %vm972 = vcmp.ge.s32.totalorder %v58, %v971
      %v973 = vstv %s970
      %vm974 = vcmp.le.s32.totalorder %v58, %v973
      %vm975 = vmand %vm972, %vm974
      %v978 = vrot.slane %v964, 6
      %v979 = vrot.slane %v965, 5
      %v980 = vsel %vm335, %v979, %v978
      %v982 = vsel %vm975, %v980, inf
      %v983 = vsub.f32 0.0, %v982
      %v984 = vmax.f32 %v943, %v983
      %v985 = vsel %vm975, %v984, %v943
      %v986 = vmin.f32 %v983, %v943
      %v987 = vsub.f32 %v986, %v985
      %v988 = vsel %vm975, %v987, 0.0
      %v989 = vmul.f32 %v988, 1.442695
      %v990 = vpow.pop %v989
      %vm991 = vcmp.gt.f32.partialorder %v983, %v943
      %v992 = vmul.f32 %v954, %v990
      %v993 = vadd.f32 %v992, 1.0
      %v994 = vadd.f32 %v954, %v990
      %v995 = vsel %vm991, %v993, %v994
      %v996 = vsel %vm975, %v995, %v954
      %997 = vrot.lane.b32.xlu0 %v982, 1
      %v998 = vpop.permute.xlu0 %997
      %v999 = vmin.f32 %v956, %v998
      %v1000 = vmin.f32 %v999, %v982
      %v1002 = vrot.slane %v1000, 1
      %v1003 = vrot.slane %v1000, 2
      %v1006 = vadd.f32 %v701, %v1002
      %v1007 = vadd.f32 %v702, %v1003
      %p1008 = scmp.gt.s32.totalorder %s714, 1
      %s1009 = scalar_select %p1008, %s714, 1
      %s1010 = sadd.s32 %s699, 8
      %p1011 = scmp.lt.s32.totalorder %s1010, 8
      %s1012 = scalar_select %p1011, %s1010, 8
      %v1013 = vstv %s1009
      %vm1014 = vcmp.ge.s32.totalorder %v58, %v1013
      %v1015 = vstv %s1012
      %vm1016 = vcmp.le.s32.totalorder %v58, %v1015
      %vm1017 = vmand %vm1014, %vm1016
      %v1020 = vrot.slane %v1006, 7
      %v1021 = vrot.slane %v1007, 6
      %v1022 = vsel %vm335, %v1021, %v1020
      %v1024 = vsel %vm1017, %v1022, inf
      %v1025 = vsub.f32 0.0, %v1024
      %v1026 = vmax.f32 %v985, %v1025
      %v1027 = vsel %vm1017, %v1026, %v985
      %v1028 = vmin.f32 %v1025, %v985
      %v1029 = vsub.f32 %v1028, %v1027
      %v1030 = vsel %vm1017, %v1029, 0.0
      %v1031 = vmul.f32 %v1030, 1.442695
      %v1032 = vpow.pop %v1031
      %vm1033 = vcmp.gt.f32.partialorder %v1025, %v985
      %v1034 = vmul.f32 %v996, %v1032
      %v1035 = vadd.f32 %v1034, 1.0
      %v1036 = vadd.f32 %v996, %v1032
      %v1037 = vsel %vm1033, %v1035, %v1036
      %v1038 = vsel %vm1017, %v1037, %v996
      %1039 = vrot.lane.b32.xlu0 %v1024, 1
      %v1040 = vpop.permute.xlu0 %1039
    $region22: #{tpu_custom_call.1} parent=1 // loop_footer
      %s693 = sadd.s32 1, %s689
    $region23: #{tpu_custom_call.1} parent=1 // loop_footer_branch
      %688 = sbr.rel target = $region19
    $region24: #{tpu_custom_call.1} parent=1 // loop_exit
      _
    %vm1041 = vcmp.ge.s32.totalorder %v58, 1
    %vm1042 = vcmp.le.s32.totalorder %v58, 8
    %vm1043 = vmand %vm1041, %vm1042
    %v1044 = vlog2.pop %v698
    %v1045 = vmul.f32 %v1044, 0.6931472
    %v1046 = vadd.f32 %v697, %v1045
    %v1047 = vsel %vm1043, %v1046, 0.0
    %vm1048 = vcmask 1041408
    %v1049 = vsel %vm1048, %v1047, 0.0
    %1050 = vadd.xlane.f32.xlu0 %v1049
    %v1051 = vpop.xlane.xlu0 %1050
    %v1052 = vrot.slane %v1051, 4
    %v1053 = vadd.f32 %v1051, %v1052
    %v1054 = vrot.slane %v1053, 2
    %v1055 = vadd.f32 %v1053, %v1054
    %v1056 = vrot.slane %v1055, 1
    %v1057 = vadd.f32 %v1055, %v1056
    %s1058 = vtos %v1057
    %s1059 = ssub.f32 0.0, %s1058
    %v1060 = vstv %s1059
    %1061 = vst [vmem:[#allocation8] sm:$0xff] %v1060
    // Predicated region
    $region25: #{tpu_custom_call.1} parent=1 // pred_check
      _
    $region26: #{tpu_custom_call.1} parent=1 // pred_check_branch
      %1063 = sbr.rel (0) target = $region28
    $region27: #{tpu_custom_call.1} parent=1 // pred_region
      %s1065 = ssub.s32 128, 128
      %1066 = vsyncadd [#allocation5], %s1065
      %s1068 = sshll.u32 [#allocation8], 4
      %s1069 = int_to_ptr.vmem [resolvable:$true] %s1068
      %1071 = dma.vmem_to_hbm [thread:$0]  %s1069, 128, %s2, [#allocation5]
    $region28: #{tpu_custom_call.1} parent=1 // pred_fallthru
      _
    // Predicated region
    $region29: #{tpu_custom_call.1} parent=1 // pred_check
      _
    $region30: #{tpu_custom_call.1} parent=1 // pred_check_branch
      %1073 = sbr.rel (0) target = $region32
    $region31: #{tpu_custom_call.1} parent=1 // pred_region
      %1074 = dma.done [#allocation5], 128
    $region32: #{tpu_custom_call.1} parent=1 // pred_fallthru
      _
    %1075 = vsyncpa [#allocation4], 1
    %1076 = vsyncpa [#allocation7], 1
    %1077 = vsyncpa [#allocation5], 1

</llo_original>
